<compile_context>
chip_gen: v7x
topology: tpu7x:2x2x1
jax: 0.10.0
libtpu: 0.0.40
codegen_flags: <defaults>
</compile_context>

<pallas_src>
import functools

import jax
import jax.numpy as jnp
from jax.experimental import pallas as pl
from jax.experimental.pallas import tpu as pltpu


# ----------------------------- Pallas kernel -------------------------------

def _bigcn_fused_kernel(root_ref,                                     # SMEM prefetch
                        x_ref, a_ref, w1p_ref, b1_ref, w2a_ref, w2b_ref,
                        b2_ref, fcm_ref, fcr_ref, fcb_ref,            # inputs
                        o_ref,                                        # (1, C) logits acc
                        xw_sc, h1_sc, hw_sc, sum2_sc):                # VMEM scratch
    f32 = jnp.float32
    b = pl.program_id(0)            # branch: 0 = TD, 1 = BU
    p = pl.program_id(1)            # pass:   0 = layer-1, 1 = layer-2 + pool + fc
    i = pl.program_id(2)            # A_hat row block
    nb = pl.num_programs(2)

    tm, n = a_ref.shape
    hid = w2a_ref.shape[0]

    # ---- one-time init (global first grid step) ----------------------------
    @pl.when((b == 0) & (p == 0) & (i == 0))
    def _init():
        # Lane-packed projection: both branches' x @ W1.T in a single matmul.
        xw_all = jnp.dot(x_ref[...], w1p_ref[...], preferred_element_type=f32)
        xw_sc[0] = xw_all[:, :hid]
        xw_sc[1] = xw_all[:, hid:]
        o_ref[...] = fcb_ref[...]                 # logits accumulator = fc bias

    a_blk = a_ref[...]                            # (tm, n), f32 or bf16
    cdt = a_blk.dtype

    # ---- pass 0: h1 row block = A_hat[rows] @ (x @ W1.T) + b1 ---------------
    @pl.when(p == 0)
    def _layer1():
        h1_blk = (jnp.dot(a_blk, xw_sc[b].astype(cdt),
                          preferred_element_type=f32) + b1_ref[...])
        row0 = pl.multiple_of(i * tm, tm)
        h1_sc[pl.ds(row0, tm), :] = h1_blk

    # ---- pass 1, first block: build hw for all rows, init pool, root FC -----
    @pl.when((p == 1) & (i == 0))
    def _start_layer2():
        root = root_ref[0]
        xroot_relu = jnp.maximum(x_ref[pl.ds(root, 1), :], 0.0)       # (1, IN)
        # relu(cat(h1, bcast(x_root))) @ W2.T == relu(h1) @ W2a + bcast(rank-1)
        root_term = jnp.dot(xroot_relu, w2b_ref[...],
                            preferred_element_type=f32)               # (1, OUT)
        hw_sc[...] = (jnp.dot(jnp.maximum(h1_sc[...], 0.0), w2a_ref[...],
                              preferred_element_type=f32) + root_term)
        sum2_sc[...] = jnp.zeros_like(sum2_sc)
        # mean(cat(h2, bcast(h1_root))) == [mean(h2) | h1_root]; fold the
        # h1_root columns of the fc into the logits now (fc_w pre-split).
        h1_root = h1_sc[pl.ds(root, 1), :]                            # (1, HID)
        o_ref[...] += jnp.dot(h1_root, fcr_ref[...], preferred_element_type=f32)

    # ---- pass 1: h2 row block + running row-sum (mean pooling) --------------
    @pl.when(p == 1)
    def _layer2():
        h2_blk = jnp.maximum(
            jnp.dot(a_blk, hw_sc[...].astype(cdt), preferred_element_type=f32)
            + b2_ref[...], 0.0)                                        # (tm, OUT)
        sum2_sc[...] += jnp.sum(h2_blk, axis=0, keepdims=True)

    # ---- pass 1, last block: branch's mean-pool contribution to the FC ------
    @pl.when((p == 1) & (i == nb - 1))
    def _finish_branch():
        mean_h2 = sum2_sc[...] * (1.0 / n)
        o_ref[...] += jnp.dot(mean_h2, fcm_ref[...], preferred_element_type=f32)

    # ---- very last grid step: log_softmax in place ---------------------------
    @pl.when((b == pl.num_programs(0) - 1) & (p == 1) & (i == nb - 1))
    def _final():
        logits = o_ref[...]
        m = jnp.max(logits, axis=1, keepdims=True)
        shifted = logits - m
        lse = jnp.log(jnp.sum(jnp.exp(shifted), axis=1, keepdims=True))
        o_ref[...] = shifted - lse


# ------------------------------- JAX glue -----------------------------------

def gcn_norm_adj(edge_index, num_nodes):
    """Dense D^{-1/2}(A+I)D^{-1/2} matching PyG GCNConv (add_self_loops=True)."""
    src, dst = edge_index[0], edge_index[1]
    loop = jnp.arange(num_nodes, dtype=src.dtype)
    src = jnp.concatenate([src, loop])
    dst = jnp.concatenate([dst, loop])
    a = jnp.zeros((num_nodes, num_nodes), jnp.float32).at[dst, src].add(1.0)
    deg = a.sum(axis=1)
    dinv = jnp.where(deg > 0, 1.0 / jnp.sqrt(deg), 0.0)
    return dinv[:, None] * a * dinv[None, :]


def build_norm_adj(edge_index, bu_edge_index, num_nodes, dtype=jnp.float32):
    """Precompute + stack both branches' A_hat ONCE per graph (cache/hoist)."""
    return jnp.stack([gcn_norm_adj(edge_index, num_nodes),
                      gcn_norm_adj(bu_edge_index, num_nodes)]).astype(dtype)


def _pick_tm(n, cap=512):
    best = n
    t = 8
    while t <= min(n, cap):
        if n % t == 0:
            best = t
        t += 8
    return best


def cam_bigcn_forward(x, a, rootindex, params, *, tm=None):
    """Fused BiGCN forward.  `a` is the pre-built (2, N, N) normalized
    adjacency [TD, BU] (f32, or bf16 for large N)."""
    n, in_f = x.shape
    w1_td, b1_td, w2_td, b2_td = params["td"]
    w1_bu, b1_bu, w2_bu, b2_bu = params["bu"]
    hid = w1_td.shape[0]
    out_f = w2_td.shape[0]
    fc_w, fc_b = params["fc_w"], params["fc_b"]
    c = fc_w.shape[0]

    if tm is None:
        tm = _pick_tm(n)
    assert n % tm == 0 and (tm % 8 == 0 or tm == n)
    nb = n // tm

    # Lane-packed W1 (one matmul covers both branches inside the kernel).
    w1p = jnp.concatenate([w1_td.T, w1_bu.T], axis=1)            # (IN, 2*HID)
    b1s = jnp.stack([b1_td[None, :], b1_bu[None, :]])            # (2, 1, HID)
    # W2 split into [h1 columns | root columns], pre-transposed.
    w2at = jnp.stack([w2_td[:, :hid].T, w2_bu[:, :hid].T])       # (2, HID, OUT)
    w2bt = jnp.stack([w2_td[:, hid:].T, w2_bu[:, hid:].T])       # (2, IN, OUT)
    b2s = jnp.stack([b2_td[None, :], b2_bu[None, :]])            # (2, 1, OUT)
    # fc input is cat(BU_x, TD_x) with per-branch cols [mean(h2) | h1_root];
    # pre-split fc_w so the kernel never concatenates (branch 0 = TD, 1 = BU).
    fcwm = jnp.stack([fc_w[:, out_f + hid:2 * out_f + hid].T,    # TD mean block
                      fc_w[:, :out_f].T])                        # BU mean block
    fcwr = jnp.stack([fc_w[:, 2 * out_f + hid:].T,               # TD root block
                      fc_w[:, out_f:out_f + hid].T])             # BU root block
    fcb = fc_b[None, :]                                          # (1, C)

    root_i32 = rootindex.astype(jnp.int32)

    # Advisory resource hints.
    a_bytes = 2 * n * n * a.dtype.itemsize
    flops = int(4 * n * n * (hid + out_f) + 4 * n * in_f * hid + 4 * n * hid * out_f)
    bytes_acc = int(2 * a_bytes + x.size * x.dtype.itemsize
                    + 4 * (w1p.size + w2at.size + w2bt.size + fcwm.size + fcwr.size)
                    + 4 * c)
    vmem_est = (2 * tm * n * a.dtype.itemsize            # double-buffered A block
                + 2 * n * in_f * 4                       # resident x
                + 4 * (2 * n * hid + n * hid + n * out_f + out_f)   # scratch
                + 4 * (w1p.size + w2at.size + w2bt.size))
    vmem_limit = int(min(100 * 2 ** 20, max(32 * 2 ** 20, 2 * vmem_est)))

    grid_spec = pltpu.PrefetchScalarGridSpec(
        num_scalar_prefetch=1,
        grid=(2, 2, nb),               # (branch, layer pass, A_hat row block)
        in_specs=[
            pl.BlockSpec((n, in_f), lambda b, p, i, r: (0, 0)),            # x (resident)
            pl.BlockSpec((None, tm, n), lambda b, p, i, r: (b, i, 0)),     # A_hat block
            pl.BlockSpec((in_f, 2 * hid), lambda b, p, i, r: (0, 0)),      # W1 packed
            pl.BlockSpec((None, 1, hid), lambda b, p, i, r: (b, 0, 0)),    # b1
            pl.BlockSpec((None, hid, out_f), lambda b, p, i, r: (b, 0, 0)),  # W2a
            pl.BlockSpec((None, in_f, out_f), lambda b, p, i, r: (b, 0, 0)),  # W2b
            pl.BlockSpec((None, 1, out_f), lambda b, p, i, r: (b, 0, 0)),  # b2
            pl.BlockSpec((None, out_f, c), lambda b, p, i, r: (b, 0, 0)),  # fc mean cols
            pl.BlockSpec((None, hid, c), lambda b, p, i, r: (b, 0, 0)),    # fc root cols
            pl.BlockSpec((1, c), lambda b, p, i, r: (0, 0)),               # fc bias
        ],
        out_specs=pl.BlockSpec((1, c), lambda b, p, i, r: (0, 0)),
        scratch_shapes=[
            pltpu.VMEM((2, n, hid), jnp.float32),   # xw = x @ W1.T, both branches
            pltpu.VMEM((n, hid), jnp.float32),      # h1 (current branch)
            pltpu.VMEM((n, out_f), jnp.float32),    # hw = h @ W2.T (current branch)
            pltpu.VMEM((1, out_f), jnp.float32),    # running row-sum of h2
        ],
    )

    return pl.pallas_call(
        _bigcn_fused_kernel,
        grid_spec=grid_spec,
        out_shape=jax.ShapeDtypeStruct((1, c), jnp.float32),
        compiler_params=pltpu.CompilerParams(
            dimension_semantics=("arbitrary", "arbitrary", "arbitrary"),
            vmem_limit_bytes=vmem_limit),
        cost_estimate=pl.CostEstimate(flops=flops, transcendentals=2 * c,
                                      bytes_accessed=bytes_acc),
    )(root_i32, x, a, w1p, b1s, w2at, w2bt, b2s, fcwm, fcwr, fcb)


# --------------------------- pure-JAX reference ------------------------------

def _reference_forward(x, edge_index, bu_edge_index, rootindex, params):
    n = x.shape[0]

    def branch(a_hat, p):
        w1, b1, w2, b2 = p
        h1 = a_hat @ (x @ w1.T) + b1[None, :]
        re1 = jnp.broadcast_to(x[rootindex[0]][None, :], (n, x.shape[1]))
        h = jnp.maximum(jnp.concatenate([h1, re1], axis=1), 0.0)
        h2 = jnp.maximum(a_hat @ (h @ w2.T) + b2[None, :], 0.0)
        re2 = jnp.broadcast_to(h1[rootindex[0]][None, :], (n, h1.shape[1]))
        return jnp.mean(jnp.concatenate([h2, re2], axis=1), axis=0, keepdims=True)

    td = branch(gcn_norm_adj(edge_index, n), params["td"])
    bu = branch(gcn_norm_adj(bu_edge_index, n), params["bu"])
    feat = jnp.concatenate([bu, td], axis=1)
    logits = feat @ params["fc_w"].T + params["fc_b"][None, :]
    return jax.nn.log_softmax(logits, axis=1)


# --------------------------------- main --------------------------------------

if __name__ == "__main__":
    N, IN_FEATS, HID_FEATS, OUT_FEATS, NUM_CLASSES = 16, 32, 16, 16, 4

    key = jax.random.PRNGKey(0)
    keys = jax.random.split(key, 8)

    x = jax.random.normal(keys[0], (N, IN_FEATS), jnp.float32)

    # Top-down tree edges (parent -> child); bottom-up is the reversal.
    src = jnp.array([(i - 1) // 2 for i in range(1, N)], jnp.int32)
    dst = jnp.arange(1, N, dtype=jnp.int32)
    edge_index = jnp.stack([src, dst])
    bu_edge_index = jnp.stack([dst, src])
    rootindex = jnp.array([0], jnp.int32)

    def init_branch(k):
        k1, k2, k3, k4 = jax.random.split(k, 4)
        w1 = 0.1 * jax.random.normal(k1, (HID_FEATS, IN_FEATS), jnp.float32)
        b1 = 0.1 * jax.random.normal(k2, (HID_FEATS,), jnp.float32)
        w2 = 0.1 * jax.random.normal(k3, (OUT_FEATS, HID_FEATS + IN_FEATS), jnp.float32)
        b2 = 0.1 * jax.random.normal(k4, (OUT_FEATS,), jnp.float32)
        return (w1, b1, w2, b2)

    params = {
        "td": init_branch(keys[1]),
        "bu": init_branch(keys[2]),
        "fc_w": 0.1 * jax.random.normal(
            keys[3], (NUM_CLASSES, 2 * (HID_FEATS + OUT_FEATS)), jnp.float32),
        "fc_b": 0.1 * jax.random.normal(keys[4], (NUM_CLASSES,), jnp.float32),
    }

    # A_hat built once per graph (hoisted out of the forward).
    a_f32 = build_norm_adj(edge_index, bu_edge_index, N)

    fwd = jax.jit(functools.partial(cam_bigcn_forward, tm=8))   # 2 row blocks
    out = jax.block_until_ready(fwd(x, a_f32, rootindex, params))

    ref = jax.block_until_ready(
        _reference_forward(x, edge_index, bu_edge_index, rootindex, params))

    assert out.shape == (1, NUM_CLASSES)
    assert bool(jnp.all(jnp.isfinite(out)))
    # log_softmax rows must (approximately) exponentiate-sum to 1.
    assert bool(jnp.allclose(jnp.sum(jnp.exp(out), axis=1), 1.0, atol=1e-5))
    # fused-kernel output must match the unfused reference semantics.
    assert bool(jnp.allclose(out, ref, atol=1e-4, rtol=1e-4))

    # bf16 A_hat path (halves streamed HBM bytes at large N); looser tolerance.
    out_bf16 = jax.block_until_ready(
        fwd(x, a_f32.astype(jnp.bfloat16), rootindex, params))
    assert bool(jnp.allclose(out_bf16, ref, atol=5e-2, rtol=5e-2))

    print("KERNEL_OK")
</pallas_src>

<mosaic_0001>
module attributes {stable_mosaic.version = 11 : i64} {
  func.func @_bigcn_fused_kernel(%arg0: i32, %arg1: i32, %arg2: i32, %arg3: memref<1xi32, #tpu.memory_space<smem>>, %arg4: memref<16x32xf32, #tpu.memory_space<vmem>>, %arg5: memref<1x8x16xf32, #tpu.memory_space<vmem>>, %arg6: memref<32x32xf32, #tpu.memory_space<vmem>>, %arg7: memref<1x1x16xf32, #tpu.memory_space<vmem>>, %arg8: memref<1x16x16xf32, #tpu.memory_space<vmem>>, %arg9: memref<1x32x16xf32, #tpu.memory_space<vmem>>, %arg10: memref<1x1x16xf32, #tpu.memory_space<vmem>>, %arg11: memref<1x16x4xf32, #tpu.memory_space<vmem>>, %arg12: memref<1x16x4xf32, #tpu.memory_space<vmem>>, %arg13: memref<1x4xf32, #tpu.memory_space<vmem>>, %arg14: memref<1x4xf32, #tpu.memory_space<vmem>>, %arg15: memref<2x16x16xf32, #tpu.memory_space<vmem>>, %arg16: memref<16x16xf32, #tpu.memory_space<vmem>>, %arg17: memref<16x16xf32, #tpu.memory_space<vmem>>, %arg18: memref<1x16xf32, #tpu.memory_space<vmem>>) attributes {dimension_semantics = [#tpu.dimension_semantics<arbitrary>, #tpu.dimension_semantics<arbitrary>, #tpu.dimension_semantics<arbitrary>], iteration_bounds = array<i64: 2, 2, 2>, scalar_prefetch = 1 : i64, scratch_operands = 4 : i64, tpu.core_type = #tpu.core_type<tc>, window_params = [{pipeline_mode = #tpu.pipeline_mode<synchronous>, transform_indices = @transform_0, window_bounds = array<i64: 16, 32>}, {transform_indices = @transform_1, window_bounds = array<i64: 1, 8, 16>}, {pipeline_mode = #tpu.pipeline_mode<synchronous>, transform_indices = @transform_2, window_bounds = array<i64: 32, 32>}, {transform_indices = @transform_3, window_bounds = array<i64: 1, 1, 16>}, {transform_indices = @transform_4, window_bounds = array<i64: 1, 16, 16>}, {transform_indices = @transform_5, window_bounds = array<i64: 1, 32, 16>}, {transform_indices = @transform_6, window_bounds = array<i64: 1, 1, 16>}, {transform_indices = @transform_7, window_bounds = array<i64: 1, 16, 4>}, {transform_indices = @transform_8, window_bounds = array<i64: 1, 16, 4>}, {pipeline_mode = #tpu.pipeline_mode<synchronous>, transform_indices = @transform_9, window_bounds = array<i64: 1, 4>}, {pipeline_mode = #tpu.pipeline_mode<synchronous>, transform_indices = @transform_10, window_bounds = array<i64: 1, 4>}]} {
    %c0_i32 = arith.constant 0 : i32
    %0 = arith.cmpi eq, %arg0, %c0_i32 : i32
    %c0_i32_0 = arith.constant 0 : i32
    %1 = arith.cmpi eq, %arg1, %c0_i32_0 : i32
    %2 = arith.andi %0, %1 : i1
    %c0_i32_1 = arith.constant 0 : i32
    %3 = arith.cmpi eq, %arg2, %c0_i32_1 : i32
    %4 = arith.andi %2, %3 : i1
    %5 = arith.extui %4 : i1 to i32
    %c0_i32_2 = arith.constant 0 : i32
    %6 = arith.cmpi ne, %5, %c0_i32_2 : i32
    scf.if %6 {
      %c0_18 = arith.constant 0 : index
      %c0_19 = arith.constant 0 : index
      %32 = vector.load %arg4[%c0_18, %c0_19] : memref<16x32xf32, #tpu.memory_space<vmem>>, vector<16x32xf32>
      %c0_20 = arith.constant 0 : index
      %c0_21 = arith.constant 0 : index
      %33 = vector.load %arg6[%c0_20, %c0_21] : memref<32x32xf32, #tpu.memory_space<vmem>>, vector<32x32xf32>
      %cst = arith.constant dense<0.000000e+00> : vector<16x32xf32>
      %34 = tpu.matmul %32, %33, %cst {dimension_numbers = #tpu.dot_dimension_numbers<[1], [0], [0], [1], [0, 0, 1, 1], [], []>} : vector<16x32xf32>, vector<32x32xf32>, vector<16x32xf32> -> vector<16x32xf32>
      %35 = vector.extract_strided_slice %34 {offsets = [0, 0], sizes = [16, 16], strides = [1, 1]} : vector<16x32xf32> to vector<16x16xf32>
      %c0_22 = arith.constant 0 : index
      %c0_23 = arith.constant 0 : index
      %c0_24 = arith.constant 0 : index
      %36 = vector.load %arg15[%c0_22, %c0_23, %c0_24] : memref<2x16x16xf32, #tpu.memory_space<vmem>>, vector<1x16x16xf32>
      %37 = vector.shape_cast %36 : vector<1x16x16xf32> to vector<16x16xf32>
      %38 = vector.shape_cast %35 : vector<16x16xf32> to vector<1x16x16xf32>
      tpu.vector_store %arg15[%c0_22, %c0_23, %c0_24], %38 {strides = array<i32>} : memref<2x16x16xf32, #tpu.memory_space<vmem>>, vector<1x16x16xf32>,
      %39 = vector.extract_strided_slice %34 {offsets = [0, 16], sizes = [16, 16], strides = [1, 1]} : vector<16x32xf32> to vector<16x16xf32>
      %c1 = arith.constant 1 : index
      %c0_25 = arith.constant 0 : index
      %c0_26 = arith.constant 0 : index
      %40 = vector.load %arg15[%c1, %c0_25, %c0_26] : memref<2x16x16xf32, #tpu.memory_space<vmem>>, vector<1x16x16xf32>
      %41 = vector.shape_cast %40 : vector<1x16x16xf32> to vector<16x16xf32>
      %42 = vector.shape_cast %39 : vector<16x16xf32> to vector<1x16x16xf32>
      tpu.vector_store %arg15[%c1, %c0_25, %c0_26], %42 {strides = array<i32>} : memref<2x16x16xf32, #tpu.memory_space<vmem>>, vector<1x16x16xf32>,
      %c0_27 = arith.constant 0 : index
      %c0_28 = arith.constant 0 : index
      %43 = vector.load %arg13[%c0_27, %c0_28] : memref<1x4xf32, #tpu.memory_space<vmem>>, vector<1x4xf32>
      %c0_29 = arith.constant 0 : index
      %c0_30 = arith.constant 0 : index
      %44 = vector.load %arg14[%c0_29, %c0_30] : memref<1x4xf32, #tpu.memory_space<vmem>>, vector<1x4xf32>
      tpu.vector_store %arg14[%c0_29, %c0_30], %43 {strides = array<i32>} : memref<1x4xf32, #tpu.memory_space<vmem>>, vector<1x4xf32>,
    } else {
    }
    %c0 = arith.constant 0 : index
    %c0_3 = arith.constant 0 : index
    %c0_4 = arith.constant 0 : index
    %7 = vector.load %arg5[%c0, %c0_3, %c0_4] : memref<1x8x16xf32, #tpu.memory_space<vmem>>, vector<1x8x16xf32>
    %8 = vector.shape_cast %7 : vector<1x8x16xf32> to vector<8x16xf32>
    %c0_i32_5 = arith.constant 0 : i32
    %9 = arith.cmpi eq, %arg1, %c0_i32_5 : i32
    %10 = arith.extui %9 : i1 to i32
    %c0_i32_6 = arith.constant 0 : i32
    %11 = arith.cmpi ne, %10, %c0_i32_6 : i32
    scf.if %11 {
      %32 = arith.index_cast %arg0 : i32 to index
      %c0_18 = arith.constant 0 : index
      %c0_19 = arith.constant 0 : index
      %33 = vector.load %arg15[%32, %c0_18, %c0_19] : memref<2x16x16xf32, #tpu.memory_space<vmem>>, vector<1x16x16xf32>
      %34 = vector.shape_cast %33 : vector<1x16x16xf32> to vector<16x16xf32>
      %cst = arith.constant dense<0.000000e+00> : vector<8x16xf32>
      %35 = tpu.matmul %8, %34, %cst {dimension_numbers = #tpu.dot_dimension_numbers<[1], [0], [0], [1], [0, 0, 1, 1], [], []>} : vector<8x16xf32>, vector<16x16xf32>, vector<8x16xf32> -> vector<8x16xf32>
      %c0_20 = arith.constant 0 : index
      %c0_21 = arith.constant 0 : index
      %c0_22 = arith.constant 0 : index
      %36 = vector.load %arg7[%c0_20, %c0_21, %c0_22] : memref<1x1x16xf32, #tpu.memory_space<vmem>>, vector<1x1x16xf32>
      %37 = vector.shape_cast %36 : vector<1x1x16xf32> to vector<1x16xf32>
      %38 = vector.broadcast %37 : vector<1x16xf32> to vector<8x16xf32>
      %39 = arith.addf %35, %38 : vector<8x16xf32>
      %c8_i32 = arith.constant 8 : i32
      %40 = arith.muli %arg2, %c8_i32 : i32
      %41 = tpu.assume_multiple %40, 8 : i32
      %42 = arith.index_cast %41 : i32 to index
      %c0_23 = arith.constant 0 : index
      %43 = vector.load %arg16[%42, %c0_23] : memref<16x16xf32, #tpu.memory_space<vmem>>, vector<8x16xf32>
      tpu.vector_store %arg16[%42, %c0_23], %39 {strides = array<i32>} : memref<16x16xf32, #tpu.memory_space<vmem>>, vector<8x16xf32>,
    } else {
    }
    %c1_i32 = arith.constant 1 : i32
    %12 = arith.cmpi eq, %arg1, %c1_i32 : i32
    %c0_i32_7 = arith.constant 0 : i32
    %13 = arith.cmpi eq, %arg2, %c0_i32_7 : i32
    %14 = arith.andi %12, %13 : i1
    %15 = arith.extui %14 : i1 to i32
    %c0_i32_8 = arith.constant 0 : i32
    %16 = arith.cmpi ne, %15, %c0_i32_8 : i32
    scf.if %16 {
      %c0_18 = arith.constant 0 : index
      %32 = memref.load %arg3[%c0_18] : memref<1xi32, #tpu.memory_space<smem>>
      %33 = arith.index_cast %32 : i32 to index
      %c0_19 = arith.constant 0 : index
      %34 = vector.load %arg4[%33, %c0_19] : memref<16x32xf32, #tpu.memory_space<vmem>>, vector<1x32xf32>
      %cst = arith.constant 0.000000e+00 : f32
      %35 = vector.broadcast %cst : f32 to vector<1x32xf32>
      %36 = arith.maximumf %34, %35 : vector<1x32xf32>
      %c0_20 = arith.constant 0 : index
      %c0_21 = arith.constant 0 : index
      %c0_22 = arith.constant 0 : index
      %37 = vector.load %arg9[%c0_20, %c0_21, %c0_22] : memref<1x32x16xf32, #tpu.memory_space<vmem>>, vector<1x32x16xf32>
      %38 = vector.shape_cast %37 : vector<1x32x16xf32> to vector<32x16xf32>
      %cst_23 = arith.constant dense<0.000000e+00> : vector<1x16xf32>
      %39 = tpu.matmul %36, %38, %cst_23 {dimension_numbers = #tpu.dot_dimension_numbers<[1], [0], [0], [1], [0, 0, 1, 1], [], []>} : vector<1x32xf32>, vector<32x16xf32>, vector<1x16xf32> -> vector<1x16xf32>
      %c0_24 = arith.constant 0 : index
      %c0_25 = arith.constant 0 : index
      %40 = vector.load %arg16[%c0_24, %c0_25] : memref<16x16xf32, #tpu.memory_space<vmem>>, vector<16x16xf32>
      %cst_26 = arith.constant 0.000000e+00 : f32
      %41 = vector.broadcast %cst_26 : f32 to vector<16x16xf32>
      %42 = arith.maximumf %40, %41 : vector<16x16xf32>
      %c0_27 = arith.constant 0 : index
      %c0_28 = arith.constant 0 : index
      %c0_29 = arith.constant 0 : index
      %43 = vector.load %arg8[%c0_27, %c0_28, %c0_29] : memref<1x16x16xf32, #tpu.memory_space<vmem>>, vector<1x16x16xf32>
      %44 = vector.shape_cast %43 : vector<1x16x16xf32> to vector<16x16xf32>
      %cst_30 = arith.constant dense<0.000000e+00> : vector<16x16xf32>
      %45 = tpu.matmul %42, %44, %cst_30 {dimension_numbers = #tpu.dot_dimension_numbers<[1], [0], [0], [1], [0, 0, 1, 1], [], []>} : vector<16x16xf32>, vector<16x16xf32>, vector<16x16xf32> -> vector<16x16xf32>
      %46 = vector.broadcast %39 : vector<1x16xf32> to vector<16x16xf32>
      %47 = arith.addf %45, %46 : vector<16x16xf32>
      %c0_31 = arith.constant 0 : index
      %c0_32 = arith.constant 0 : index
      %48 = vector.load %arg17[%c0_31, %c0_32] : memref<16x16xf32, #tpu.memory_space<vmem>>, vector<16x16xf32>
      tpu.vector_store %arg17[%c0_31, %c0_32], %47 {strides = array<i32>} : memref<16x16xf32, #tpu.memory_space<vmem>>, vector<16x16xf32>,
      %cst_33 = arith.constant 0.000000e+00 : f32
      %49 = vector.broadcast %cst_33 : f32 to vector<1x16xf32>
      %c0_34 = arith.constant 0 : index
      %c0_35 = arith.constant 0 : index
      %50 = vector.load %arg18[%c0_34, %c0_35] : memref<1x16xf32, #tpu.memory_space<vmem>>, vector<1x16xf32>
      tpu.vector_store %arg18[%c0_34, %c0_35], %49 {strides = array<i32>} : memref<1x16xf32, #tpu.memory_space<vmem>>, vector<1x16xf32>,
      %51 = arith.index_cast %32 : i32 to index
      %c0_36 = arith.constant 0 : index
      %52 = vector.load %arg16[%51, %c0_36] : memref<16x16xf32, #tpu.memory_space<vmem>>, vector<1x16xf32>
      %c0_37 = arith.constant 0 : index
      %c0_38 = arith.constant 0 : index
      %53 = vector.load %arg14[%c0_37, %c0_38] : memref<1x4xf32, #tpu.memory_space<vmem>>, vector<1x4xf32>
      %c0_39 = arith.constant 0 : index
      %c0_40 = arith.constant 0 : index
      %c0_41 = arith.constant 0 : index
      %54 = vector.load %arg12[%c0_39, %c0_40, %c0_41] : memref<1x16x4xf32, #tpu.memory_space<vmem>>, vector<1x16x4xf32>
      %55 = vector.shape_cast %54 : vector<1x16x4xf32> to vector<16x4xf32>
      %cst_42 = arith.constant dense<0.000000e+00> : vector<1x4xf32>
      %56 = tpu.matmul %52, %55, %cst_42 {dimension_numbers = #tpu.dot_dimension_numbers<[1], [0], [0], [1], [0, 0, 1, 1], [], []>} : vector<1x16xf32>, vector<16x4xf32>, vector<1x4xf32> -> vector<1x4xf32>
      %57 = arith.addf %53, %56 : vector<1x4xf32>
      %c0_43 = arith.constant 0 : index
      %c0_44 = arith.constant 0 : index
      %58 = vector.load %arg14[%c0_43, %c0_44] : memref<1x4xf32, #tpu.memory_space<vmem>>, vector<1x4xf32>
      tpu.vector_store %arg14[%c0_43, %c0_44], %57 {strides = array<i32>} : memref<1x4xf32, #tpu.memory_space<vmem>>, vector<1x4xf32>,
    } else {
    }
    %c1_i32_9 = arith.constant 1 : i32
    %17 = arith.cmpi eq, %arg1, %c1_i32_9 : i32
    %18 = arith.extui %17 : i1 to i32
    %c0_i32_10 = arith.constant 0 : i32
    %19 = arith.cmpi ne, %18, %c0_i32_10 : i32
    scf.if %19 {
      %c0_18 = arith.constant 0 : index
      %c0_19 = arith.constant 0 : index
      %32 = vector.load %arg17[%c0_18, %c0_19] : memref<16x16xf32, #tpu.memory_space<vmem>>, vector<16x16xf32>
      %cst = arith.constant dense<0.000000e+00> : vector<8x16xf32>
      %33 = tpu.matmul %8, %32, %cst {dimension_numbers = #tpu.dot_dimension_numbers<[1], [0], [0], [1], [0, 0, 1, 1], [], []>} : vector<8x16xf32>, vector<16x16xf32>, vector<8x16xf32> -> vector<8x16xf32>
      %c0_20 = arith.constant 0 : index
      %c0_21 = arith.constant 0 : index
      %c0_22 = arith.constant 0 : index
      %34 = vector.load %arg10[%c0_20, %c0_21, %c0_22] : memref<1x1x16xf32, #tpu.memory_space<vmem>>, vector<1x1x16xf32>
      %35 = vector.shape_cast %34 : vector<1x1x16xf32> to vector<1x16xf32>
      %36 = vector.broadcast %35 : vector<1x16xf32> to vector<8x16xf32>
      %37 = arith.addf %33, %36 : vector<8x16xf32>
      %cst_23 = arith.constant 0.000000e+00 : f32
      %38 = vector.broadcast %cst_23 : f32 to vector<8x16xf32>
      %39 = arith.maximumf %37, %38 : vector<8x16xf32>
      %c0_24 = arith.constant 0 : index
      %c0_25 = arith.constant 0 : index
      %40 = vector.load %arg18[%c0_24, %c0_25] : memref<1x16xf32, #tpu.memory_space<vmem>>, vector<1x16xf32>
      %cst_26 = arith.constant dense<0.000000e+00> : vector<16xf32>
      %41 = vector.multi_reduction <add>, %39, %cst_26 [0] : vector<8x16xf32> to vector<16xf32>
      %42 = vector.shape_cast %41 : vector<16xf32> to vector<1x16xf32>
      %43 = arith.addf %40, %42 : vector<1x16xf32>
      %c0_27 = arith.constant 0 : index
      %c0_28 = arith.constant 0 : index
      %44 = vector.load %arg18[%c0_27, %c0_28] : memref<1x16xf32, #tpu.memory_space<vmem>>, vector<1x16xf32>
      tpu.vector_store %arg18[%c0_27, %c0_28], %43 {strides = array<i32>} : memref<1x16xf32, #tpu.memory_space<vmem>>, vector<1x16xf32>,
    } else {
    }
    %c1_i32_11 = arith.constant 1 : i32
    %20 = arith.cmpi eq, %arg1, %c1_i32_11 : i32
    %c1_i32_12 = arith.constant 1 : i32
    %21 = arith.cmpi eq, %arg2, %c1_i32_12 : i32
    %22 = arith.andi %20, %21 : i1
    %23 = arith.extui %22 : i1 to i32
    %c0_i32_13 = arith.constant 0 : i32
    %24 = arith.cmpi ne, %23, %c0_i32_13 : i32
    scf.if %24 {
      %c0_18 = arith.constant 0 : index
      %c0_19 = arith.constant 0 : index
      %32 = vector.load %arg18[%c0_18, %c0_19] : memref<1x16xf32, #tpu.memory_space<vmem>>, vector<1x16xf32>
      %cst = arith.constant 6.250000e-02 : f32
      %33 = vector.broadcast %cst : f32 to vector<1x16xf32>
      %34 = arith.mulf %32, %33 : vector<1x16xf32>
      %c0_20 = arith.constant 0 : index
      %c0_21 = arith.constant 0 : index
      %35 = vector.load %arg14[%c0_20, %c0_21] : memref<1x4xf32, #tpu.memory_space<vmem>>, vector<1x4xf32>
      %c0_22 = arith.constant 0 : index
      %c0_23 = arith.constant 0 : index
      %c0_24 = arith.constant 0 : index
      %36 = vector.load %arg11[%c0_22, %c0_23, %c0_24] : memref<1x16x4xf32, #tpu.memory_space<vmem>>, vector<1x16x4xf32>
      %37 = vector.shape_cast %36 : vector<1x16x4xf32> to vector<16x4xf32>
      %cst_25 = arith.constant dense<0.000000e+00> : vector<1x4xf32>
      %38 = tpu.matmul %34, %37, %cst_25 {dimension_numbers = #tpu.dot_dimension_numbers<[1], [0], [0], [1], [0, 0, 1, 1], [], []>} : vector<1x16xf32>, vector<16x4xf32>, vector<1x4xf32> -> vector<1x4xf32>
      %39 = arith.addf %35, %38 : vector<1x4xf32>
      %c0_26 = arith.constant 0 : index
      %c0_27 = arith.constant 0 : index
      %40 = vector.load %arg14[%c0_26, %c0_27] : memref<1x4xf32, #tpu.memory_space<vmem>>, vector<1x4xf32>
      tpu.vector_store %arg14[%c0_26, %c0_27], %39 {strides = array<i32>} : memref<1x4xf32, #tpu.memory_space<vmem>>, vector<1x4xf32>,
    } else {
    }
    %c1_i32_14 = arith.constant 1 : i32
    %25 = arith.cmpi eq, %arg0, %c1_i32_14 : i32
    %c1_i32_15 = arith.constant 1 : i32
    %26 = arith.cmpi eq, %arg1, %c1_i32_15 : i32
    %27 = arith.andi %25, %26 : i1
    %c1_i32_16 = arith.constant 1 : i32
    %28 = arith.cmpi eq, %arg2, %c1_i32_16 : i32
    %29 = arith.andi %27, %28 : i1
    %30 = arith.extui %29 : i1 to i32
    %c0_i32_17 = arith.constant 0 : i32
    %31 = arith.cmpi ne, %30, %c0_i32_17 : i32
    scf.if %31 {
      %c0_18 = arith.constant 0 : index
      %c0_19 = arith.constant 0 : index
      %32 = vector.load %arg14[%c0_18, %c0_19] : memref<1x4xf32, #tpu.memory_space<vmem>>, vector<1x4xf32>
      %cst = arith.constant dense<0xFF800000> : vector<1xf32>
      %33 = vector.multi_reduction <maximumf>, %32, %cst [1] : vector<1x4xf32> to vector<1xf32>
      %34 = vector.shape_cast %33 : vector<1xf32> to vector<1x1xf32>
      %35 = vector.broadcast %34 : vector<1x1xf32> to vector<1x4xf32>
      %36 = arith.subf %32, %35 : vector<1x4xf32>
      %37 = math.exp %36 : vector<1x4xf32>
      %cst_20 = arith.constant dense<0.000000e+00> : vector<1xf32>
      %38 = vector.multi_reduction <add>, %37, %cst_20 [1] : vector<1x4xf32> to vector<1xf32>
      %39 = vector.shape_cast %38 : vector<1xf32> to vector<1x1xf32>
      %40 = math.log %39 : vector<1x1xf32>
      %41 = vector.broadcast %40 : vector<1x1xf32> to vector<1x4xf32>
      %42 = arith.subf %36, %41 : vector<1x4xf32>
      %c0_21 = arith.constant 0 : index
      %c0_22 = arith.constant 0 : index
      %43 = vector.load %arg14[%c0_21, %c0_22] : memref<1x4xf32, #tpu.memory_space<vmem>>, vector<1x4xf32>
      tpu.vector_store %arg14[%c0_21, %c0_22], %42 {strides = array<i32>} : memref<1x4xf32, #tpu.memory_space<vmem>>, vector<1x4xf32>,
    } else {
    }
    return
  }
  func.func @transform_0(%arg0: i32, %arg1: i32, %arg2: i32, %arg3: memref<1xi32, #tpu.memory_space<smem>>) -> (i32, i32) {
    %c0_i32 = arith.constant 0 : i32
    %c0_i32_0 = arith.constant 0 : i32
    %c0_i32_1 = arith.constant 0 : i32
    return %c0_i32, %c0_i32_0 : i32, i32
  }
  func.func @transform_1(%arg0: i32, %arg1: i32, %arg2: i32, %arg3: memref<1xi32, #tpu.memory_space<smem>>) -> (i32, i32, i32) {
    %c0_i32 = arith.constant 0 : i32
    %c0_i32_0 = arith.constant 0 : i32
    return %arg0, %arg2, %c0_i32 : i32, i32, i32
  }
  func.func @transform_2(%arg0: i32, %arg1: i32, %arg2: i32, %arg3: memref<1xi32, #tpu.memory_space<smem>>) -> (i32, i32) {
    %c0_i32 = arith.constant 0 : i32
    %c0_i32_0 = arith.constant 0 : i32
    %c0_i32_1 = arith.constant 0 : i32
    return %c0_i32, %c0_i32_0 : i32, i32
  }
  func.func @transform_3(%arg0: i32, %arg1: i32, %arg2: i32, %arg3: memref<1xi32, #tpu.memory_space<smem>>) -> (i32, i32, i32) {
    %c0_i32 = arith.constant 0 : i32
    %c0_i32_0 = arith.constant 0 : i32
    %c0_i32_1 = arith.constant 0 : i32
    return %arg0, %c0_i32, %c0_i32_0 : i32, i32, i32
  }
  func.func @transform_4(%arg0: i32, %arg1: i32, %arg2: i32, %arg3: memref<1xi32, #tpu.memory_space<smem>>) -> (i32, i32, i32) {
    %c0_i32 = arith.constant 0 : i32
    %c0_i32_0 = arith.constant 0 : i32
    %c0_i32_1 = arith.constant 0 : i32
    return %arg0, %c0_i32, %c0_i32_0 : i32, i32, i32
  }
  func.func @transform_5(%arg0: i32, %arg1: i32, %arg2: i32, %arg3: memref<1xi32, #tpu.memory_space<smem>>) -> (i32, i32, i32) {
    %c0_i32 = arith.constant 0 : i32
    %c0_i32_0 = arith.constant 0 : i32
    %c0_i32_1 = arith.constant 0 : i32
    return %arg0, %c0_i32, %c0_i32_0 : i32, i32, i32
  }
  func.func @transform_6(%arg0: i32, %arg1: i32, %arg2: i32, %arg3: memref<1xi32, #tpu.memory_space<smem>>) -> (i32, i32, i32) {
    %c0_i32 = arith.constant 0 : i32
    %c0_i32_0 = arith.constant 0 : i32
    %c0_i32_1 = arith.constant 0 : i32
    return %arg0, %c0_i32, %c0_i32_0 : i32, i32, i32
  }
  func.func @transform_7(%arg0: i32, %arg1: i32, %arg2: i32, %arg3: memref<1xi32, #tpu.memory_space<smem>>) -> (i32, i32, i32) {
    %c0_i32 = arith.constant 0 : i32
    %c0_i32_0 = arith.constant 0 : i32
    %c0_i32_1 = arith.constant 0 : i32
    return %arg0, %c0_i32, %c0_i32_0 : i32, i32, i32
  }
  func.func @transform_8(%arg0: i32, %arg1: i32, %arg2: i32, %arg3: memref<1xi32, #tpu.memory_space<smem>>) -> (i32, i32, i32) {
    %c0_i32 = arith.constant 0 : i32
    %c0_i32_0 = arith.constant 0 : i32
    %c0_i32_1 = arith.constant 0 : i32
    return %arg0, %c0_i32, %c0_i32_0 : i32, i32, i32
  }
  func.func @transform_9(%arg0: i32, %arg1: i32, %arg2: i32, %arg3: memref<1xi32, #tpu.memory_space<smem>>) -> (i32, i32) {
    %c0_i32 = arith.constant 0 : i32
    %c0_i32_0 = arith.constant 0 : i32
    %c0_i32_1 = arith.constant 0 : i32
    return %c0_i32, %c0_i32_0 : i32, i32
  }
  func.func @transform_10(%arg0: i32, %arg1: i32, %arg2: i32, %arg3: memref<1xi32, #tpu.memory_space<smem>>) -> (i32, i32) {
    %c0_i32 = arith.constant 0 : i32
    %c0_i32_0 = arith.constant 0 : i32
    %c0_i32_1 = arith.constant 0 : i32
    return %c0_i32, %c0_i32_0 : i32, i32
  }
}

</mosaic_0001>

<llo_original>
// kernel: cam_bigcn_forward.1
$region0: #{cam_bigcn_forward.1}
  #allocation0 [shape = 'u32[]', space=smem, size = 0x4, offset = 0x4, fixed_abs, tag = 'smem constant byte address 0x4 - core index']
  #allocation1 [shape = 'u32[144,128]{1,0:T(1,128)}', space=vmem, size = 0x12000, scoped, tag = 'internal scratch']
  #allocation2 [shape = 'f32[2,16,16]{2,1,0:T(8,128)}', space=vmem, size = 0x4000, scoped, tag = 'scratch operand']
  #allocation3 [shape = 'f32[16,16]{1,0:T(8,128)}', space=vmem, size = 0x2000, scoped, tag = 'scratch operand']
  #allocation4 [shape = 'f32[16,16]{1,0:T(8,128)}', space=vmem, size = 0x2000, scoped, tag = 'scratch operand']
  #allocation5 [shape = 'f32[1,16]{1,0:T(1,128)}', space=vmem, size = 0x200, scoped, tag = 'scratch operand']
  #allocation6 [shape = 's32[1]{0}', space=sflag, size = 0x4, scoped, tag = 'scoped memory for cam_bigcn_forward.1']
  #allocation7 [shape = 's32[1]{0:T(128)S(6)}', space=smem, size = 0x200, scoped, tag = 'prefetched SMEM operand 0']
  %s0 = inlined_call_operand.<no memory space> [shape: s32[1], index: 0, kind: input, shape index: {}]
  %s1 = inlined_call_operand.vmem [shape: f32[16,32], index: 1, kind: input, shape index: {}]
  %s2 = inlined_call_operand.vmem [shape: f32[2,16,16], index: 2, kind: input, shape index: {}]
  %s3 = inlined_call_operand.vmem [shape: f32[32,32], index: 3, kind: input, shape index: {}]
  %s4 = inlined_call_operand.vmem [shape: f32[2,1,16], index: 4, kind: input, shape index: {}]
  %s5 = inlined_call_operand.vmem [shape: f32[2,16,16], index: 5, kind: input, shape index: {}]
  %s6 = inlined_call_operand.vmem [shape: f32[2,32,16], index: 6, kind: input, shape index: {}]
  %s7 = inlined_call_operand.vmem [shape: f32[2,1,16], index: 7, kind: input, shape index: {}]
  %s8 = inlined_call_operand.vmem [shape: f32[2,16,4], index: 8, kind: input, shape index: {}]
  %s9 = inlined_call_operand.vmem [shape: f32[2,16,4], index: 9, kind: input, shape index: {}]
  %s10 = inlined_call_operand.vmem [shape: f32[1,4], index: 10, kind: input, shape index: {}]
  %s11 = inlined_call_operand.hbm [shape: f32[1,4], index: 11, kind: output, shape index: {}]
  %s12 = sld [smem:[#allocation0]]
  $region97: #{cam_bigcn_forward.1} parent=0
    _
  %s14 = ssub.s32 1, %s12
  %s15 = scalar_select 0, %s14, %s12
  %16 = sst [smem:[#allocation7]] %s0
  $region1: #{cam_bigcn_forward.1} parent=0
    #allocation8 [shape = 'u8[512]{0}', space=vmem, size = 0x400, scoped, tag = 'output window, operand 0, single buffered']
    #allocation9 [shape = 's32[2]{0}', space=sflag, size = 0x8, scoped, tag = 'scoped memory for cam_bigcn_forward.1']
    %17 = vsyncpa [#allocation9], 0
    loop: start=0, step=1, limit=10
    $region2: #{cam_bigcn_forward.1} parent=1 // loop_pre_header
      _
    $region3: #{cam_bigcn_forward.1} parent=1 // loop_header
      %s19 = sphi 0, %s23
      %p20 = scmp.ge.s32.totalorder %s19, 10
      %s26 = sphi 0, %s45
      %s27 = sphi 0, %s41
      %s28 = sphi 0, %s37
      %s29 = sphi 0, %s26
      %s30 = sphi 0, %s27
      %s31 = sphi 0, %s28
      %s32 = sphi 0, %s29
      %s33 = sphi 0, %s30
      %s34 = sphi 0, %s31
      %s46 = sphi 0, %s46
      %s48 = sphi 0, %s46
      %s49 = sphi 0, %s48
      %s63 = sphi 0, %s49
      %s71 = sphi 0, %s73
      %s74 = sphi 0, %s71
      %s75 = sphi 0, %s74
      %s91 = sphi 0, %s75
      %s95 = sphi 0, %s95
      %s97 = sphi 0, %s95
      %s98 = sphi 0, %s97
      %s112 = sphi 0, %s98
      %s118 = sphi 0, %s120
      %s121 = sphi 0, %s118
      %s122 = sphi 0, %s121
      %s138 = sphi 0, %s122
      %s144 = sphi 0, %s146
      %s147 = sphi 0, %s144
      %s148 = sphi 0, %s147
      %s164 = sphi 0, %s148
      %s170 = sphi 0, %s172
      %s173 = sphi 0, %s170
      %s174 = sphi 0, %s173
      %s190 = sphi 0, %s174
      %s196 = sphi 0, %s198
      %s199 = sphi 0, %s196
      %s200 = sphi 0, %s199
      %s216 = sphi 0, %s200
      %s222 = sphi 0, %s224
      %s225 = sphi 0, %s222
      %s226 = sphi 0, %s225
      %s242 = sphi 0, %s226
      %s248 = sphi 0, %s250
      %s251 = sphi 0, %s248
      %s252 = sphi 0, %s251
      %s268 = sphi 0, %s252
      %s272 = sphi 0, %s272
      %s274 = sphi 0, %s272
      %s275 = sphi 0, %s274
      %s289 = sphi 0, %s275
      %s293 = sphi 0, %s293
      %s295 = sphi 0, %s293
      %s296 = sphi 0, %s295
      %s310 = sphi 0, %s296
    $region4: #{cam_bigcn_forward.1} parent=1 // loop_header_branch
      %22 = sbr.rel (%p20) target = $region8
    $region5: #{cam_bigcn_forward.1} parent=1 // loop_body
      %s24 = ssub.s32 %s19, 1
      %s25 = ssub.s32 %s19, 2
      %s35 = sadd.s32 1, %s28
      %p36 = scmp.ge.s32.totalorder %s35, 2
      %s37 = scalar_select %p36, 0, %s35
      %s38 = sadd.s32 1, %s27
      %s39 = scalar_select %p36, %s38, %s27
      %p40 = scmp.ge.s32.totalorder %s39, 2
      %s41 = scalar_select %p40, 0, %s39
      %s42 = sadd.s32 1, %s26
      %s43 = scalar_select %p40, %s42, %s26
      %p44 = scmp.ge.s32.totalorder %s43, 2
      %s45 = scalar_select %p44, 0, %s43
      %s47 = sadd.s32 %s46, 1
      %p50 = scmp.eq.s32.totalorder %s19, 7
      %p51 = scmp.ne.s32.totalorder %s46, %s48
      %p52 = scmp.eq.s32.totalorder %s19, 0
      %p53 = por %p51, %p52
      %p54 = scmp.ne.s32.totalorder %s46, %s48
      %p55 = scmp.eq.s32.totalorder %s24, 7
      %p56 = por %p54, %p55
      %p57 = scmp.ne.s32.totalorder %s48, %s49
      %p58 = scmp.eq.s32.totalorder %s24, 0
      %p59 = por %p57, %p58
      %p60 = scmp.ne.s32.totalorder %s48, %s49
      %p61 = scmp.eq.s32.totalorder %s25, 7
      %p62 = por %p60, %p61
      %p64 = scmp.ne.s32.totalorder %s49, %s63
      %p65 = scmp.eq.s32.totalorder %s25, 0
      %p66 = por %p64, %p65
      %s67 = ssub.s32 %s26, %s45
      %s68 = ssub.s32 %s28, %s37
      %s69 = sor.u32 %s67, %s68
      %p70 = scmp.eq.s32.totalorder %s69, 0
      %s72 = sadd.s32 %s71, 1
      %s73 = scalar_select %p70, %s71, %s72
      %p76 = pneg %p70
      %p77 = scmp.eq.s32.totalorder %s19, 7
      %p78 = por %p76, %p77
      %p79 = scmp.ne.s32.totalorder %s71, %s74
      %p80 = scmp.eq.s32.totalorder %s19, 0
      %p81 = por %p79, %p80
      %p82 = scmp.ne.s32.totalorder %s71, %s74
      %p83 = scmp.eq.s32.totalorder %s24, 7
      %p84 = por %p82, %p83
      %p85 = scmp.ne.s32.totalorder %s74, %s75
      %p86 = scmp.eq.s32.totalorder %s24, 0
      %p87 = por %p85, %p86
      %p88 = scmp.ne.s32.totalorder %s74, %s75
      %p89 = scmp.eq.s32.totalorder %s25, 7
      %p90 = por %p88, %p89
      %p92 = scmp.ne.s32.totalorder %s75, %s91
      %p93 = scmp.eq.s32.totalorder %s25, 0
      %p94 = por %p92, %p93
      %s96 = sadd.s32 %s95, 1
      %p99 = scmp.eq.s32.totalorder %s19, 7
      %p100 = scmp.ne.s32.totalorder %s95, %s97
      %p101 = scmp.eq.s32.totalorder %s19, 0
      %p102 = por %p100, %p101
      %p103 = scmp.ne.s32.totalorder %s95, %s97
      %p104 = scmp.eq.s32.totalorder %s24, 7
      %p105 = por %p103, %p104
      %p106 = scmp.ne.s32.totalorder %s97, %s98
      %p107 = scmp.eq.s32.totalorder %s24, 0
      %p108 = por %p106, %p107
      %p109 = scmp.ne.s32.totalorder %s97, %s98
      %p110 = scmp.eq.s32.totalorder %s25, 7
      %p111 = por %p109, %p110
      %p113 = scmp.ne.s32.totalorder %s98, %s112
      %p114 = scmp.eq.s32.totalorder %s25, 0
      %p115 = por %p113, %p114
      %s116 = ssub.s32 %s26, %s45
      %p117 = scmp.eq.s32.totalorder %s116, 0
      %s119 = sadd.s32 %s118, 1
      %s120 = scalar_select %p117, %s118, %s119
      %p123 = pneg %p117
      %p124 = scmp.eq.s32.totalorder %s19, 7
      %p125 = por %p123, %p124
      %p126 = scmp.ne.s32.totalorder %s118, %s121
      %p127 = scmp.eq.s32.totalorder %s19, 0
      %p128 = por %p126, %p127
      %p129 = scmp.ne.s32.totalorder %s118, %s121
      %p130 = scmp.eq.s32.totalorder %s24, 7
      %p131 = por %p129, %p130
      %p132 = scmp.ne.s32.totalorder %s121, %s122
      %p133 = scmp.eq.s32.totalorder %s24, 0
      %p134 = por %p132, %p133
      %p135 = scmp.ne.s32.totalorder %s121, %s122
      %p136 = scmp.eq.s32.totalorder %s25, 7
      %p137 = por %p135, %p136
      %p139 = scmp.ne.s32.totalorder %s122, %s138
      %p140 = scmp.eq.s32.totalorder %s25, 0
      %p141 = por %p139, %p140
      %s142 = ssub.s32 %s26, %s45
      %p143 = scmp.eq.s32.totalorder %s142, 0
      %s145 = sadd.s32 %s144, 1
      %s146 = scalar_select %p143, %s144, %s145
      %p149 = pneg %p143
      %p150 = scmp.eq.s32.totalorder %s19, 7
      %p151 = por %p149, %p150
      %p152 = scmp.ne.s32.totalorder %s144, %s147
      %p153 = scmp.eq.s32.totalorder %s19, 0
      %p154 = por %p152, %p153
      %p155 = scmp.ne.s32.totalorder %s144, %s147
      %p156 = scmp.eq.s32.totalorder %s24, 7
      %p157 = por %p155, %p156
      %p158 = scmp.ne.s32.totalorder %s147, %s148
      %p159 = scmp.eq.s32.totalorder %s24, 0
      %p160 = por %p158, %p159
      %p161 = scmp.ne.s32.totalorder %s147, %s148
      %p162 = scmp.eq.s32.totalorder %s25, 7
      %p163 = por %p161, %p162
      %p165 = scmp.ne.s32.totalorder %s148, %s164
      %p166 = scmp.eq.s32.totalorder %s25, 0
      %p167 = por %p165, %p166
      %s168 = ssub.s32 %s26, %s45
      %p169 = scmp.eq.s32.totalorder %s168, 0
      %s171 = sadd.s32 %s170, 1
      %s172 = scalar_select %p169, %s170, %s171
      %p175 = pneg %p169
      %p176 = scmp.eq.s32.totalorder %s19, 7
      %p177 = por %p175, %p176
      %p178 = scmp.ne.s32.totalorder %s170, %s173
      %p179 = scmp.eq.s32.totalorder %s19, 0
      %p180 = por %p178, %p179
      %p181 = scmp.ne.s32.totalorder %s170, %s173
      %p182 = scmp.eq.s32.totalorder %s24, 7
      %p183 = por %p181, %p182
      %p184 = scmp.ne.s32.totalorder %s173, %s174
      %p185 = scmp.eq.s32.totalorder %s24, 0
      %p186 = por %p184, %p185
      %p187 = scmp.ne.s32.totalorder %s173, %s174
      %p188 = scmp.eq.s32.totalorder %s25, 7
      %p189 = por %p187, %p188
      %p191 = scmp.ne.s32.totalorder %s174, %s190
      %p192 = scmp.eq.s32.totalorder %s25, 0
      %p193 = por %p191, %p192
      %s194 = ssub.s32 %s26, %s45
      %p195 = scmp.eq.s32.totalorder %s194, 0
      %s197 = sadd.s32 %s196, 1
      %s198 = scalar_select %p195, %s196, %s197
      %p201 = pneg %p195
      %p202 = scmp.eq.s32.totalorder %s19, 7
      %p203 = por %p201, %p202
      %p204 = scmp.ne.s32.totalorder %s196, %s199
      %p205 = scmp.eq.s32.totalorder %s19, 0
      %p206 = por %p204, %p205
      %p207 = scmp.ne.s32.totalorder %s196, %s199
      %p208 = scmp.eq.s32.totalorder %s24, 7
      %p209 = por %p207, %p208
      %p210 = scmp.ne.s32.totalorder %s199, %s200
      %p211 = scmp.eq.s32.totalorder %s24, 0
      %p212 = por %p210, %p211
      %p213 = scmp.ne.s32.totalorder %s199, %s200
      %p214 = scmp.eq.s32.totalorder %s25, 7
      %p215 = por %p213, %p214
      %p217 = scmp.ne.s32.totalorder %s200, %s216
      %p218 = scmp.eq.s32.totalorder %s25, 0
      %p219 = por %p217, %p218
      %s220 = ssub.s32 %s26, %s45
      %p221 = scmp.eq.s32.totalorder %s220, 0
      %s223 = sadd.s32 %s222, 1
      %s224 = scalar_select %p221, %s222, %s223
      %p227 = pneg %p221
      %p228 = scmp.eq.s32.totalorder %s19, 7
      %p229 = por %p227, %p228
      %p230 = scmp.ne.s32.totalorder %s222, %s225
      %p231 = scmp.eq.s32.totalorder %s19, 0
      %p232 = por %p230, %p231
      %p233 = scmp.ne.s32.totalorder %s222, %s225
      %p234 = scmp.eq.s32.totalorder %s24, 7
      %p235 = por %p233, %p234
      %p236 = scmp.ne.s32.totalorder %s225, %s226
      %p237 = scmp.eq.s32.totalorder %s24, 0
      %p238 = por %p236, %p237
      %p239 = scmp.ne.s32.totalorder %s225, %s226
      %p240 = scmp.eq.s32.totalorder %s25, 7
      %p241 = por %p239, %p240
      %p243 = scmp.ne.s32.totalorder %s226, %s242
      %p244 = scmp.eq.s32.totalorder %s25, 0
      %p245 = por %p243, %p244
      %s246 = ssub.s32 %s26, %s45
      %p247 = scmp.eq.s32.totalorder %s246, 0
      %s249 = sadd.s32 %s248, 1
      %s250 = scalar_select %p247, %s248, %s249
      %p253 = pneg %p247
      %p254 = scmp.eq.s32.totalorder %s19, 7
      %p255 = por %p253, %p254
      %p256 = scmp.ne.s32.totalorder %s248, %s251
      %p257 = scmp.eq.s32.totalorder %s19, 0
      %p258 = por %p256, %p257
      %p259 = scmp.ne.s32.totalorder %s248, %s251
      %p260 = scmp.eq.s32.totalorder %s24, 7
      %p261 = por %p259, %p260
      %p262 = scmp.ne.s32.totalorder %s251, %s252
      %p263 = scmp.eq.s32.totalorder %s24, 0
      %p264 = por %p262, %p263
      %p265 = scmp.ne.s32.totalorder %s251, %s252
      %p266 = scmp.eq.s32.totalorder %s25, 7
      %p267 = por %p265, %p266
      %p269 = scmp.ne.s32.totalorder %s252, %s268
      %p270 = scmp.eq.s32.totalorder %s25, 0
      %p271 = por %p269, %p270
      %s273 = sadd.s32 %s272, 1
      %p276 = scmp.eq.s32.totalorder %s19, 7
      %p277 = scmp.ne.s32.totalorder %s272, %s274
      %p278 = scmp.eq.s32.totalorder %s19, 0
      %p279 = por %p277, %p278
      %p280 = scmp.ne.s32.totalorder %s272, %s274
      %p281 = scmp.eq.s32.totalorder %s24, 7
      %p282 = por %p280, %p281
      %p283 = scmp.ne.s32.totalorder %s274, %s275
      %p284 = scmp.eq.s32.totalorder %s24, 0
      %p285 = por %p283, %p284
      %p286 = scmp.ne.s32.totalorder %s274, %s275
      %p287 = scmp.eq.s32.totalorder %s25, 7
      %p288 = por %p286, %p287
      %p290 = scmp.ne.s32.totalorder %s275, %s289
      %p291 = scmp.eq.s32.totalorder %s25, 0
      %p292 = por %p290, %p291
      %s294 = sadd.s32 %s293, 1
      %p297 = scmp.eq.s32.totalorder %s19, 7
      %p298 = scmp.ne.s32.totalorder %s293, %s295
      %p299 = scmp.eq.s32.totalorder %s19, 0
      %p300 = por %p298, %p299
      %p301 = scmp.ne.s32.totalorder %s293, %s295
      %p302 = scmp.eq.s32.totalorder %s24, 7
      %p303 = por %p301, %p302
      %p304 = scmp.ne.s32.totalorder %s295, %s296
      %p305 = scmp.eq.s32.totalorder %s24, 0
      %p306 = por %p304, %p305
      %p307 = scmp.ne.s32.totalorder %s295, %s296
      %p308 = scmp.eq.s32.totalorder %s25, 7
      %p309 = por %p307, %p308
      %p311 = scmp.ne.s32.totalorder %s296, %s310
      %p312 = scmp.eq.s32.totalorder %s25, 0
      %p313 = por %p311, %p312
      %p314 = scmp.le.s32.totalorder 1, %s19
      %p315 = scmp.lt.s32.totalorder %s19, 9
      %p316 = pnand %p314, %p315
      %p317 = pneg %p316
      // Predicated region
      $region9: #{cam_bigcn_forward.1} parent=5 // pred_check
        _
      $region10: #{cam_bigcn_forward.1} parent=5 // pred_check_branch
        %319 = sbr.rel (%p316) target = $region12
      $region11: #{cam_bigcn_forward.1} parent=5 // pred_region
        %s320 = ssub.s32 %s19, 1
        // Predicated region
        $region13: #{cam_bigcn_forward.1} parent=11 // pred_check
          %p321 = pneg %p59
        $region14: #{cam_bigcn_forward.1} parent=11 // pred_check_branch
          %323 = sbr.rel (%p321) target = $region16
        $region15: #{cam_bigcn_forward.1} parent=11 // pred_region
          _
        $region16: #{cam_bigcn_forward.1} parent=11 // pred_fallthru
          _
        // Predicated region
        $region17: #{cam_bigcn_forward.1} parent=11 // pred_check
          %p324 = pneg %p108
        $region18: #{cam_bigcn_forward.1} parent=11 // pred_check_branch
          %326 = sbr.rel (%p324) target = $region20
        $region19: #{cam_bigcn_forward.1} parent=11 // pred_region
          _
        $region20: #{cam_bigcn_forward.1} parent=11 // pred_fallthru
          _
        // Predicated region
        $region21: #{cam_bigcn_forward.1} parent=11 // pred_check
          %p327 = pneg %p285
        $region22: #{cam_bigcn_forward.1} parent=11 // pred_check_branch
          %329 = sbr.rel (%p327) target = $region24
        $region23: #{cam_bigcn_forward.1} parent=11 // pred_region
          _
        $region24: #{cam_bigcn_forward.1} parent=11 // pred_fallthru
          _
      $region12: #{cam_bigcn_forward.1} parent=5 // pred_fallthru
        _
      %p330 = scmp.lt.s32.totalorder %s19, 8
      // Predicated region
      $region25: #{cam_bigcn_forward.1} parent=5 // pred_check
        %p331 = pneg %p330
      $region26: #{cam_bigcn_forward.1} parent=5 // pred_check_branch
        %333 = sbr.rel (%p331) target = $region28
      $region27: #{cam_bigcn_forward.1} parent=5 // pred_region
        // Predicated region
        $region29: #{cam_bigcn_forward.1} parent=27 // pred_check
          %p334 = pneg %p81
        $region30: #{cam_bigcn_forward.1} parent=27 // pred_check_branch
          %336 = sbr.rel (%p334) target = $region32
        $region31: #{cam_bigcn_forward.1} parent=27 // pred_region
          %p337 = scmp.lt.s32.totalorder %s26, 1
          %s338 = scalar_select %p337, %s26, 1
          %p339 = scmp.lt.s32.totalorder %s28, 1
          %s340 = scalar_select %p339, %s28, 1
          %s341 = smul.addr %s338, 2
          %s342 = sadd.s32 %s340, %s341
          %s343 = smul.addr %s342, 8
          %s344 = scalar_lea.vmem %s2, %s343
        $region32: #{cam_bigcn_forward.1} parent=27 // pred_fallthru
          _
        // Predicated region
        $region33: #{cam_bigcn_forward.1} parent=27 // pred_check
          %p345 = pneg %p128
        $region34: #{cam_bigcn_forward.1} parent=27 // pred_check_branch
          %347 = sbr.rel (%p345) target = $region36
        $region35: #{cam_bigcn_forward.1} parent=27 // pred_region
          %p348 = scmp.lt.s32.totalorder %s26, 1
          %s349 = scalar_select %p348, %s26, 1
          %s350 = scalar_lea.vmem %s4, %s349
        $region36: #{cam_bigcn_forward.1} parent=27 // pred_fallthru
          _
        // Predicated region
        $region37: #{cam_bigcn_forward.1} parent=27 // pred_check
          %p351 = pneg %p154
        $region38: #{cam_bigcn_forward.1} parent=27 // pred_check_branch
          %353 = sbr.rel (%p351) target = $region40
        $region39: #{cam_bigcn_forward.1} parent=27 // pred_region
          %p354 = scmp.lt.s32.totalorder %s26, 1
          %s355 = scalar_select %p354, %s26, 1
          %s356 = smul.addr %s355, 2
          %s357 = smul.addr %s356, 8
          %s358 = scalar_lea.vmem %s5, %s357
        $region40: #{cam_bigcn_forward.1} parent=27 // pred_fallthru
          _
        // Predicated region
        $region41: #{cam_bigcn_forward.1} parent=27 // pred_check
          %p359 = pneg %p180
        $region42: #{cam_bigcn_forward.1} parent=27 // pred_check_branch
          %361 = sbr.rel (%p359) target = $region44
        $region43: #{cam_bigcn_forward.1} parent=27 // pred_region
          %p362 = scmp.lt.s32.totalorder %s26, 1
          %s363 = scalar_select %p362, %s26, 1
          %s364 = smul.addr %s363, 4
          %s365 = smul.addr %s364, 8
          %s366 = scalar_lea.vmem %s6, %s365
        $region44: #{cam_bigcn_forward.1} parent=27 // pred_fallthru
          _
        // Predicated region
        $region45: #{cam_bigcn_forward.1} parent=27 // pred_check
          %p367 = pneg %p206
        $region46: #{cam_bigcn_forward.1} parent=27 // pred_check_branch
          %369 = sbr.rel (%p367) target = $region48
        $region47: #{cam_bigcn_forward.1} parent=27 // pred_region
          %p370 = scmp.lt.s32.totalorder %s26, 1
          %s371 = scalar_select %p370, %s26, 1
          %s372 = scalar_lea.vmem %s7, %s371
        $region48: #{cam_bigcn_forward.1} parent=27 // pred_fallthru
          _
        // Predicated region
        $region49: #{cam_bigcn_forward.1} parent=27 // pred_check
          %p373 = pneg %p232
        $region50: #{cam_bigcn_forward.1} parent=27 // pred_check_branch
          %375 = sbr.rel (%p373) target = $region52
        $region51: #{cam_bigcn_forward.1} parent=27 // pred_region
          %p376 = scmp.lt.s32.totalorder %s26, 1
          %s377 = scalar_select %p376, %s26, 1
          %s378 = smul.addr %s377, 2
          %s379 = smul.addr %s378, 8
          %s380 = scalar_lea.vmem %s8, %s379
        $region52: #{cam_bigcn_forward.1} parent=27 // pred_fallthru
          _
        // Predicated region
        $region53: #{cam_bigcn_forward.1} parent=27 // pred_check
          %p381 = pneg %p258
        $region54: #{cam_bigcn_forward.1} parent=27 // pred_check_branch
          %383 = sbr.rel (%p381) target = $region56
        $region55: #{cam_bigcn_forward.1} parent=27 // pred_region
          %p384 = scmp.lt.s32.totalorder %s26, 1
          %s385 = scalar_select %p384, %s26, 1
          %s386 = smul.addr %s385, 2
          %s387 = smul.addr %s386, 8
          %s388 = scalar_lea.vmem %s9, %s387
        $region56: #{cam_bigcn_forward.1} parent=27 // pred_fallthru
          _
      $region28: #{cam_bigcn_forward.1} parent=5 // pred_fallthru
        _
      %p389 = scmp.le.s32.totalorder 1, %s19
      %p390 = scmp.lt.s32.totalorder %s19, 9
      %p391 = pnand %p389, %p390
      %p392 = pneg %p391
      // Predicated region
      $region57: #{cam_bigcn_forward.1} parent=5 // pred_check
        _
      $region58: #{cam_bigcn_forward.1} parent=5 // pred_check_branch
        %394 = sbr.rel (%p391) target = $region60
      $region59: #{cam_bigcn_forward.1} parent=5 // pred_region
        %s395 = ssub.s32 %s19, 1
        %p396 = pneg %p59
        %p397 = pneg %p56
        %p398 = scmp.lt.s32.totalorder %s29, 1
        %s399 = scalar_select %p398, %s29, 1
        %p400 = scmp.lt.s32.totalorder %s31, 1
        %s401 = scalar_select %p400, %s31, 1
        %s402 = smul.addr %s399, 2
        %s403 = sadd.s32 %s401, %s402
        %s404 = smul.addr %s403, 8
        %s405 = scalar_lea.vmem %s2, %s404
        %p406 = pneg %p87
        %p407 = pneg %p84
        %p408 = pneg %p108
        %p409 = pneg %p105
        %p410 = scmp.lt.s32.totalorder %s29, 1
        %s411 = scalar_select %p410, %s29, 1
        %s412 = scalar_lea.vmem %s4, %s411
        %p413 = pneg %p134
        %p414 = pneg %p131
        %p415 = scmp.lt.s32.totalorder %s29, 1
        %s416 = scalar_select %p415, %s29, 1
        %s417 = smul.addr %s416, 2
        %s418 = smul.addr %s417, 8
        %s419 = scalar_lea.vmem %s5, %s418
        %p420 = pneg %p160
        %p421 = pneg %p157
        %p422 = scmp.lt.s32.totalorder %s29, 1
        %s423 = scalar_select %p422, %s29, 1
        %s424 = smul.addr %s423, 4
        %s425 = smul.addr %s424, 8
        %s426 = scalar_lea.vmem %s6, %s425
        %p427 = pneg %p186
        %p428 = pneg %p183
        %p429 = scmp.lt.s32.totalorder %s29, 1
        %s430 = scalar_select %p429, %s29, 1
        %s431 = scalar_lea.vmem %s7, %s430
        %p432 = pneg %p212
        %p433 = pneg %p209
        %p434 = scmp.lt.s32.totalorder %s29, 1
        %s435 = scalar_select %p434, %s29, 1
        %s436 = smul.addr %s435, 2
        %s437 = smul.addr %s436, 8
        %s438 = scalar_lea.vmem %s8, %s437
        %p439 = pneg %p238
        %p440 = pneg %p235
        %p441 = scmp.lt.s32.totalorder %s29, 1
        %s442 = scalar_select %p441, %s29, 1
        %s443 = smul.addr %s442, 2
        %s444 = smul.addr %s443, 8
        %s445 = scalar_lea.vmem %s9, %s444
        %p446 = pneg %p264
        %p447 = pneg %p261
        %p448 = pneg %p285
        %p449 = pneg %p282
        %p450 = pneg %p306
        %p451 = pneg %p303
        %p452 = scmp.lt.s32.totalorder %s29, 1
        %s453 = scalar_select %p452, %s29, 1
        %p454 = scmp.lt.s32.totalorder %s31, 1
        %s455 = scalar_select %p454, %s31, 1
        %s456 = smul.addr %s453, 2
        %s457 = sadd.s32 %s455, %s456
        %s458 = smul.addr %s457, 8
        %s459 = scalar_lea.vmem %s2, %s458
        %p460 = scmp.lt.s32.totalorder %s29, 1
        %s461 = scalar_select %p460, %s29, 1
        %s462 = scalar_lea.vmem %s4, %s461
        %p463 = scmp.lt.s32.totalorder %s29, 1
        %s464 = scalar_select %p463, %s29, 1
        %s465 = smul.addr %s464, 2
        %s466 = smul.addr %s465, 8
        %s467 = scalar_lea.vmem %s5, %s466
        %p468 = scmp.lt.s32.totalorder %s29, 1
        %s469 = scalar_select %p468, %s29, 1
        %s470 = smul.addr %s469, 4
        %s471 = smul.addr %s470, 8
        %s472 = scalar_lea.vmem %s6, %s471
        %p473 = scmp.lt.s32.totalorder %s29, 1
        %s474 = scalar_select %p473, %s29, 1
        %s475 = scalar_lea.vmem %s7, %s474
        %p476 = scmp.lt.s32.totalorder %s29, 1
        %s477 = scalar_select %p476, %s29, 1
        %s478 = smul.addr %s477, 2
        %s479 = smul.addr %s478, 8
        %s480 = scalar_lea.vmem %s8, %s479
        %p481 = scmp.lt.s32.totalorder %s29, 1
        %s482 = scalar_select %p481, %s29, 1
        %s483 = smul.addr %s482, 2
        %s484 = smul.addr %s483, 8
        %s485 = scalar_lea.vmem %s9, %s484
        %p486 = scmp.eq.s32.totalorder %s29, 0
        %p487 = scmp.eq.s32.totalorder %s30, 0
        %p488 = pnand %p486, %p487
        %p489 = pneg %p488
        %p490 = scmp.eq.s32.totalorder %s31, 0
        %p491 = pnand %p489, %p490
        %p492 = pneg %p491
        // Predicated region
        $region61: #{cam_bigcn_forward.1} parent=59 // pred_check
          _
        $region62: #{cam_bigcn_forward.1} parent=59 // pred_check_branch
          %494 = sbr.rel (%p491) target = $region64
        $region63: #{cam_bigcn_forward.1} parent=59 // pred_region
          %v495 = vld [vmem:[%s1] sm:$0xff]
          %v496 = vld [vmem:[%s1 + $0x8] sm:$0xff]
          %v497 = vld [vmem:[%s3] sm:$0xff]
          %v498 = vld [vmem:[%s3 + $0x8] sm:$0xff]
          %v499 = vld [vmem:[%s3 + $0x10] sm:$0xff]
          %v500 = vld [vmem:[%s3 + $0x18] sm:$0xff]
          %vm501 = vcmask 261120
          %v503 = vsel %vm501, %v495, 0
          %v506 = vsel %vm501, %v496, 0
          %508 = vmatprep.subr.mxu0 0.0
          %509 = vmatpush1.msra.mxu0 %v497
          %510 = vmatprep.subr.mxu0 0.0
          %511 = vmatpush1.msra.mxu0 %v498
          %512 = vmatprep.subr.mxu0 0.0
          %513 = vmatpush1.msra.mxu0 %v499
          %514 = vmatprep.subr.mxu0 0.0
          %515 = vmatpush1.msra.mxu0 %v500
          %516 = vmatprep.subr.mxu0 0.0
          %517 = vmatpush1.msra.mxu0 0.0
          %518 = vmatprep.subr.mxu0 0.0
          %519 = vmatpush1.msra.mxu0 0.0
          %520 = vmatprep.subr.mxu0 0.0
          %521 = vmatpush1.msra.mxu0 0.0
          %522 = vmatprep.subr.mxu0 0.0
          %523 = vmatpush1.msra.mxu0 0.0
          %524 = vmatprep.subr.mxu0 0.0
          %525 = vmatpush1.msra.mxu0 0.0
          %526 = vmatprep.subr.mxu0 0.0
          %527 = vmatpush1.msra.mxu0 0.0
          %528 = vmatprep.subr.mxu0 0.0
          %529 = vmatpush1.msra.mxu0 0.0
          %530 = vmatprep.subr.mxu0 0.0
          %531 = vmatpush1.msra.mxu0 0.0
          %532 = vmatprep.subr.mxu0 0.0
          %533 = vmatpush1.msra.mxu0 0.0
          %534 = vmatprep.subr.mxu0 0.0
          %535 = vmatpush1.msra.mxu0 0.0
          %536 = vmatprep.subr.mxu0 0.0
          %537 = vmatpush1.msra.mxu0 0.0
          %538 = vmatprep.subr.mxu0 0.0
          %539 = vmatpush1.msra.mxu0 0.0
          %540 = vmatprep.subr.mxu0 0.0
          %541 = vmatpush1.msra.mxu0 0.0
          %542 = vmatprep.subr.mxu0 0.0
          %543 = vmatpush1.msra.mxu0 0.0
          %544 = vmatprep.subr.mxu0 0.0
          %545 = vmatpush1.msra.mxu0 0.0
          %546 = vmatprep.subr.mxu0 0.0
          %547 = vmatpush1.msra.mxu0 0.0
          %548 = vmatprep.subr.mxu0 0.0
          %549 = vmatpush1.msra.mxu0 0.0
          %550 = vmatprep.subr.mxu0 0.0
          %551 = vmatpush1.msra.mxu0 0.0
          %552 = vmatprep.subr.mxu0 0.0
          %553 = vmatpush1.msra.mxu0 0.0
          %554 = vmatprep.subr.mxu0 0.0
          %555 = vmatpush1.msra.mxu0 0.0
          %556 = vmatprep.subr.mxu0 0.0
          %557 = vmatpush1.msra.mxu0 0.0
          %558 = vmatprep.subr.mxu0 0.0
          %559 = vmatpush1.msra.mxu0 0.0
          %560 = vmatprep.subr.mxu0 0.0
          %561 = vmatpush1.msra.mxu0 0.0
          %562 = vmatprep.subr.mxu0 0.0
          %563 = vmatpush1.msra.mxu0 0.0
          %564 = vmatprep.subr.mxu0 0.0
          %565 = vmatpush1.msra.mxu0 0.0
          %566 = vmatprep.subr.mxu0 0.0
          %567 = vmatpush1.msra.mxu0 0.0
          %568 = vmatprep.subr.mxu0 0.0
          %569 = vmatpush1.msra.mxu0 0.0
          %570 = vmatprep.subr.mxu0 0.0
          %571 = vmatpush1.msra.mxu0 0.0
          %572 = vmatprep.mubr.f32.mxu0 0.0
          %573 = vmatmul.mubr.f32.gmra.mrb[0].mxu0 %v503
          %v574 = vpop.f32.mrb[0].mxu0
          %v575 = vadd.f32 0.0, %v574
          %v576 = vpop.f32.mrb[0].mxu0
          %577 = vmatprep.mubr.f32.mxu0 0.0
          %578 = vmatmul.mubr.f32.gmra.mrb[0].mxu0 %v506
          %v579 = vpop.f32.mrb[0].mxu0
          %v580 = vadd.f32 0.0, %v579
          %v581 = vpop.f32.mrb[0].mxu0
          %582 = vdwg.mxu0
          %vm583 = vcmask 130048
          %584 = vst.msk [vmem:[#allocation2] sm:$0xff] %vm583, %v575
          %585 = vst.msk [vmem:[#allocation2 + $0x8] sm:$0xff] %vm583, %v580
          %588 = vrot.lane.b32.xlu0 %v575, 112
          %v589 = vpop.permute.xlu0 %588
          %590 = vrot.lane.b32.xlu0 %v580, 112
          %v591 = vpop.permute.xlu0 %590
          %s594 = scalar_lea.vmem [#allocation2], 16
          %595 = vst.msk [vmem:[%s594] sm:$0xff] %vm583, %v589
          %596 = vst.msk [vmem:[%s594 + $0x8] sm:$0xff] %vm583, %v591
          %v597 = vld [vmem:[%s10] sm:$0x1]
          %vm598 = vcmask 24576
          %599 = vst.msk [vmem:[#allocation8] sm:$0x1] %vm598, %v597
        $region64: #{cam_bigcn_forward.1} parent=59 // pred_fallthru
          _
        %v600 = vld [vmem:[%s459] sm:$0xff]
        // Predicated region
        $region65: #{cam_bigcn_forward.1} parent=59 // pred_check
          %p601 = pneg %p487
        $region66: #{cam_bigcn_forward.1} parent=59 // pred_check_branch
          %603 = sbr.rel (%p601) target = $region68
        $region67: #{cam_bigcn_forward.1} parent=59 // pred_region
          %s604 = smul.u32 %s29, 16
          %s605 = scalar_lea.vmem [#allocation2], %s604
          %v606 = vld [vmem:[%s605] sm:$0xff]
          %v607 = vld [vmem:[%s605 + $0x8] sm:$0xff]
          %v608 = vld [vmem:[%s462] sm:$0x1]
          %v610 = vlaneseq
          %v611 = vshrl.u32 %v610, 7
          %v612 = vsub.s32 0, %v611
          %v613 = vrot.slane %v608, %v612
          %vm615 = vcmask 130048
          %v617 = vsel %vm615, %v600, 0
          %619 = vmatprep.subr.mxu0 0.0
          %620 = vmatpush1.msra.mxu0 %v606
          %621 = vmatprep.subr.mxu0 0.0
          %622 = vmatpush1.msra.mxu0 %v607
          %623 = vmatprep.subr.mxu0 0.0
          %624 = vmatpush1.msra.mxu0 0.0
          %625 = vmatprep.subr.mxu0 0.0
          %626 = vmatpush1.msra.mxu0 0.0
          %627 = vmatprep.subr.mxu0 0.0
          %628 = vmatpush1.msra.mxu0 0.0
          %629 = vmatprep.subr.mxu0 0.0
          %630 = vmatpush1.msra.mxu0 0.0
          %631 = vmatprep.subr.mxu0 0.0
          %632 = vmatpush1.msra.mxu0 0.0
          %633 = vmatprep.subr.mxu0 0.0
          %634 = vmatpush1.msra.mxu0 0.0
          %635 = vmatprep.subr.mxu0 0.0
          %636 = vmatpush1.msra.mxu0 0.0
          %637 = vmatprep.subr.mxu0 0.0
          %638 = vmatpush1.msra.mxu0 0.0
          %639 = vmatprep.subr.mxu0 0.0
          %640 = vmatpush1.msra.mxu0 0.0
          %641 = vmatprep.subr.mxu0 0.0
          %642 = vmatpush1.msra.mxu0 0.0
          %643 = vmatprep.subr.mxu0 0.0
          %644 = vmatpush1.msra.mxu0 0.0
          %645 = vmatprep.subr.mxu0 0.0
          %646 = vmatpush1.msra.mxu0 0.0
          %647 = vmatprep.subr.mxu0 0.0
          %648 = vmatpush1.msra.mxu0 0.0
          %649 = vmatprep.subr.mxu0 0.0
          %650 = vmatpush1.msra.mxu0 0.0
          %651 = vmatprep.subr.mxu0 0.0
          %652 = vmatpush1.msra.mxu0 0.0
          %653 = vmatprep.subr.mxu0 0.0
          %654 = vmatpush1.msra.mxu0 0.0
          %655 = vmatprep.subr.mxu0 0.0
          %656 = vmatpush1.msra.mxu0 0.0
          %657 = vmatprep.subr.mxu0 0.0
          %658 = vmatpush1.msra.mxu0 0.0
          %659 = vmatprep.subr.mxu0 0.0
          %660 = vmatpush1.msra.mxu0 0.0
          %661 = vmatprep.subr.mxu0 0.0
          %662 = vmatpush1.msra.mxu0 0.0
          %663 = vmatprep.subr.mxu0 0.0
          %664 = vmatpush1.msra.mxu0 0.0
          %665 = vmatprep.subr.mxu0 0.0
          %666 = vmatpush1.msra.mxu0 0.0
          %667 = vmatprep.subr.mxu0 0.0
          %668 = vmatpush1.msra.mxu0 0.0
          %669 = vmatprep.subr.mxu0 0.0
          %670 = vmatpush1.msra.mxu0 0.0
          %671 = vmatprep.subr.mxu0 0.0
          %672 = vmatpush1.msra.mxu0 0.0
          %673 = vmatprep.subr.mxu0 0.0
          %674 = vmatpush1.msra.mxu0 0.0
          %675 = vmatprep.subr.mxu0 0.0
          %676 = vmatpush1.msra.mxu0 0.0
          %677 = vmatprep.subr.mxu0 0.0
          %678 = vmatpush1.msra.mxu0 0.0
          %679 = vmatprep.subr.mxu0 0.0
          %680 = vmatpush1.msra.mxu0 0.0
          %681 = vmatprep.subr.mxu0 0.0
          %682 = vmatpush1.msra.mxu0 0.0
          %683 = vmatprep.mubr.f32.mxu0 0.0
          %684 = vmatmul.mubr.f32.gmra.mrb[0].mxu0 %v617
          %v685 = vpop.f32.mrb[0].mxu0
          %v686 = vadd.f32 %v613, %v685
          %v687 = vpop.f32.mrb[0].mxu0
          %688 = vdwg.mxu0
          %s689 = smul.u32 %s31, 8
          %s690 = scalar_lea.vmem [#allocation3], %s689
          %691 = vst.msk [vmem:[%s690] sm:$0xff] %vm615, %v686
        $region68: #{cam_bigcn_forward.1} parent=59 // pred_fallthru
          _
        %p692 = scmp.eq.s32.totalorder %s30, 1
        %p693 = pnand %p692, %p490
        %p694 = pneg %p693
        // Predicated region
        $region69: #{cam_bigcn_forward.1} parent=59 // pred_check
          _
        $region70: #{cam_bigcn_forward.1} parent=59 // pred_check_branch
          %696 = sbr.rel (%p693) target = $region72
        $region71: #{cam_bigcn_forward.1} parent=59 // pred_region
          %s697 = sld [smem:[#allocation7]]
          %s698 = scalar_lea.vmem %s1, %s697
          %v699 = vld [vmem:[%s698] sm:$0x1]
          %v700 = vmax.f32 %v699, 0.0
          %v701 = vld [vmem:[%s472] sm:$0xff]
          %v702 = vld [vmem:[%s472 + $0x8] sm:$0xff]
          %v703 = vld [vmem:[%s472 + $0x10] sm:$0xff]
          %v704 = vld [vmem:[%s472 + $0x18] sm:$0xff]
          %vm705 = vcmask 261120
          %v707 = vsel %vm705, %v700, 0
          %709 = vmatprep.subr.mxu0 0.0
          %710 = vmatpush1.msra.mxu0 %v701
          %711 = vmatprep.subr.mxu0 0.0
          %712 = vmatpush1.msra.mxu0 %v702
          %713 = vmatprep.subr.mxu0 0.0
          %714 = vmatpush1.msra.mxu0 %v703
          %715 = vmatprep.subr.mxu0 0.0
          %716 = vmatpush1.msra.mxu0 %v704
          %717 = vmatprep.subr.mxu0 0.0
          %718 = vmatpush1.msra.mxu0 0.0
          %719 = vmatprep.subr.mxu0 0.0
          %720 = vmatpush1.msra.mxu0 0.0
          %721 = vmatprep.subr.mxu0 0.0
          %722 = vmatpush1.msra.mxu0 0.0
          %723 = vmatprep.subr.mxu0 0.0
          %724 = vmatpush1.msra.mxu0 0.0
          %725 = vmatprep.subr.mxu0 0.0
          %726 = vmatpush1.msra.mxu0 0.0
          %727 = vmatprep.subr.mxu0 0.0
          %728 = vmatpush1.msra.mxu0 0.0
          %729 = vmatprep.subr.mxu0 0.0
          %730 = vmatpush1.msra.mxu0 0.0
          %731 = vmatprep.subr.mxu0 0.0
          %732 = vmatpush1.msra.mxu0 0.0
          %733 = vmatprep.subr.mxu0 0.0
          %734 = vmatpush1.msra.mxu0 0.0
          %735 = vmatprep.subr.mxu0 0.0
          %736 = vmatpush1.msra.mxu0 0.0
          %737 = vmatprep.subr.mxu0 0.0
          %738 = vmatpush1.msra.mxu0 0.0
          %739 = vmatprep.subr.mxu0 0.0
          %740 = vmatpush1.msra.mxu0 0.0
          %741 = vmatprep.subr.mxu0 0.0
          %742 = vmatpush1.msra.mxu0 0.0
          %743 = vmatprep.subr.mxu0 0.0
          %744 = vmatpush1.msra.mxu0 0.0
          %745 = vmatprep.subr.mxu0 0.0
          %746 = vmatpush1.msra.mxu0 0.0
          %747 = vmatprep.subr.mxu0 0.0
          %748 = vmatpush1.msra.mxu0 0.0
          %749 = vmatprep.subr.mxu0 0.0
          %750 = vmatpush1.msra.mxu0 0.0
          %751 = vmatprep.subr.mxu0 0.0
          %752 = vmatpush1.msra.mxu0 0.0
          %753 = vmatprep.subr.mxu0 0.0
          %754 = vmatpush1.msra.mxu0 0.0
          %755 = vmatprep.subr.mxu0 0.0
          %756 = vmatpush1.msra.mxu0 0.0
          %757 = vmatprep.subr.mxu0 0.0
          %758 = vmatpush1.msra.mxu0 0.0
          %759 = vmatprep.subr.mxu0 0.0
          %760 = vmatpush1.msra.mxu0 0.0
          %761 = vmatprep.subr.mxu0 0.0
          %762 = vmatpush1.msra.mxu0 0.0
          %763 = vmatprep.subr.mxu0 0.0
          %764 = vmatpush1.msra.mxu0 0.0
          %765 = vmatprep.subr.mxu0 0.0
          %766 = vmatpush1.msra.mxu0 0.0
          %767 = vmatprep.subr.mxu0 0.0
          %768 = vmatpush1.msra.mxu0 0.0
          %769 = vmatprep.subr.mxu0 0.0
          %770 = vmatpush1.msra.mxu0 0.0
          %771 = vmatprep.subr.mxu0 0.0
          %772 = vmatpush1.msra.mxu0 0.0
          %773 = vmatprep.mubr.f32.mxu0 0.0
          %774 = vmatmul.mubr.f32.gmra.mrb[0].mxu0 %v707
          %v775 = vpop.f32.mrb[0].mxu0
          %v776 = vadd.f32 0.0, %v775
          %v777 = vpop.f32.mrb[0].mxu0
          %778 = vdwg.mxu0
          %v779 = vld [vmem:[#allocation3] sm:$0xff]
          %v780 = vld [vmem:[#allocation3 + $0x8] sm:$0xff]
          %v781 = vmax.f32 %v779, 0.0
          %v782 = vmax.f32 %v780, 0.0
          %v783 = vld [vmem:[%s467] sm:$0xff]
          %v784 = vld [vmem:[%s467 + $0x8] sm:$0xff]
          %v785 = vlaneseq
          %v786 = vshrl.u32 %v785, 7
          %v787 = vsub.s32 0, %v786
          %v788 = vrot.slane %v776, %v787
          %vm789 = vcmask 130048
          %v791 = vsel %vm789, %v781, 0
          %v794 = vsel %vm789, %v782, 0
          %796 = vmatprep.subr.mxu0 0.0
          %797 = vmatpush1.msra.mxu0 %v783
          %798 = vmatprep.subr.mxu0 0.0
          %799 = vmatpush1.msra.mxu0 %v784
          %800 = vmatprep.subr.mxu0 0.0
          %801 = vmatpush1.msra.mxu0 0.0
          %802 = vmatprep.subr.mxu0 0.0
          %803 = vmatpush1.msra.mxu0 0.0
          %804 = vmatprep.subr.mxu0 0.0
          %805 = vmatpush1.msra.mxu0 0.0
          %806 = vmatprep.subr.mxu0 0.0
          %807 = vmatpush1.msra.mxu0 0.0
          %808 = vmatprep.subr.mxu0 0.0
          %809 = vmatpush1.msra.mxu0 0.0
          %810 = vmatprep.subr.mxu0 0.0
          %811 = vmatpush1.msra.mxu0 0.0
          %812 = vmatprep.subr.mxu0 0.0
          %813 = vmatpush1.msra.mxu0 0.0
          %814 = vmatprep.subr.mxu0 0.0
          %815 = vmatpush1.msra.mxu0 0.0
          %816 = vmatprep.subr.mxu0 0.0
          %817 = vmatpush1.msra.mxu0 0.0
          %818 = vmatprep.subr.mxu0 0.0
          %819 = vmatpush1.msra.mxu0 0.0
          %820 = vmatprep.subr.mxu0 0.0
          %821 = vmatpush1.msra.mxu0 0.0
          %822 = vmatprep.subr.mxu0 0.0
          %823 = vmatpush1.msra.mxu0 0.0
          %824 = vmatprep.subr.mxu0 0.0
          %825 = vmatpush1.msra.mxu0 0.0
          %826 = vmatprep.subr.mxu0 0.0
          %827 = vmatpush1.msra.mxu0 0.0
          %828 = vmatprep.subr.mxu0 0.0
          %829 = vmatpush1.msra.mxu0 0.0
          %830 = vmatprep.subr.mxu0 0.0
          %831 = vmatpush1.msra.mxu0 0.0
          %832 = vmatprep.subr.mxu0 0.0
          %833 = vmatpush1.msra.mxu0 0.0
          %834 = vmatprep.subr.mxu0 0.0
          %835 = vmatpush1.msra.mxu0 0.0
          %836 = vmatprep.subr.mxu0 0.0
          %837 = vmatpush1.msra.mxu0 0.0
          %838 = vmatprep.subr.mxu0 0.0
          %839 = vmatpush1.msra.mxu0 0.0
          %840 = vmatprep.subr.mxu0 0.0
          %841 = vmatpush1.msra.mxu0 0.0
          %842 = vmatprep.subr.mxu0 0.0
          %843 = vmatpush1.msra.mxu0 0.0
          %844 = vmatprep.subr.mxu0 0.0
          %845 = vmatpush1.msra.mxu0 0.0
          %846 = vmatprep.subr.mxu0 0.0
          %847 = vmatpush1.msra.mxu0 0.0
          %848 = vmatprep.subr.mxu0 0.0
          %849 = vmatpush1.msra.mxu0 0.0
          %850 = vmatprep.subr.mxu0 0.0
          %851 = vmatpush1.msra.mxu0 0.0
          %852 = vmatprep.subr.mxu0 0.0
          %853 = vmatpush1.msra.mxu0 0.0
          %854 = vmatprep.subr.mxu0 0.0
          %855 = vmatpush1.msra.mxu0 0.0
          %856 = vmatprep.subr.mxu0 0.0
          %857 = vmatpush1.msra.mxu0 0.0
          %858 = vmatprep.subr.mxu0 0.0
          %859 = vmatpush1.msra.mxu0 0.0
          %860 = vmatprep.mubr.f32.mxu0 0.0
          %861 = vmatmul.mubr.f32.gmra.mrb[0].mxu0 %v791
          %v862 = vpop.f32.mrb[0].mxu0
          %v863 = vadd.f32 %v788, %v862
          %v864 = vpop.f32.mrb[0].mxu0
          %865 = vmatprep.mubr.f32.mxu0 0.0
          %866 = vmatmul.mubr.f32.gmra.mrb[0].mxu0 %v794
          %v867 = vpop.f32.mrb[0].mxu0
          %v868 = vadd.f32 %v788, %v867
          %v869 = vpop.f32.mrb[0].mxu0
          %870 = vdwg.mxu0
          %871 = vst.msk [vmem:[#allocation4] sm:$0xff] %vm789, %v863
          %872 = vst.msk [vmem:[#allocation4 + $0x8] sm:$0xff] %vm789, %v868
          %vm873 = vcmask 122880
          %874 = vst.msk [vmem:[#allocation5] sm:$0x1] %vm873, 0.0
          %s875 = scalar_lea.vmem [#allocation3], %s697
          %v876 = vld [vmem:[%s875] sm:$0x1]
          %v877 = vld [vmem:[#allocation8] sm:$0x1]
          %v878 = vld [vmem:[%s485] sm:$0xff]
          %v879 = vld [vmem:[%s485 + $0x8] sm:$0xff]
          %v881 = vsel %vm789, %v876, 0
          %883 = vmatprep.subr.mxu0 0.0
          %884 = vmatpush1.msra.mxu0 %v878
          %885 = vmatprep.subr.mxu0 0.0
          %886 = vmatpush1.msra.mxu0 %v879
          %887 = vmatprep.subr.mxu0 0.0
          %888 = vmatpush1.msra.mxu0 0.0
          %889 = vmatprep.subr.mxu0 0.0
          %890 = vmatpush1.msra.mxu0 0.0
          %891 = vmatprep.subr.mxu0 0.0
          %892 = vmatpush1.msra.mxu0 0.0
          %893 = vmatprep.subr.mxu0 0.0
          %894 = vmatpush1.msra.mxu0 0.0
          %895 = vmatprep.subr.mxu0 0.0
          %896 = vmatpush1.msra.mxu0 0.0
          %897 = vmatprep.subr.mxu0 0.0
          %898 = vmatpush1.msra.mxu0 0.0
          %899 = vmatprep.subr.mxu0 0.0
          %900 = vmatpush1.msra.mxu0 0.0
          %901 = vmatprep.subr.mxu0 0.0
          %902 = vmatpush1.msra.mxu0 0.0
          %903 = vmatprep.subr.mxu0 0.0
          %904 = vmatpush1.msra.mxu0 0.0
          %905 = vmatprep.subr.mxu0 0.0
          %906 = vmatpush1.msra.mxu0 0.0
          %907 = vmatprep.subr.mxu0 0.0
          %908 = vmatpush1.msra.mxu0 0.0
          %909 = vmatprep.subr.mxu0 0.0
          %910 = vmatpush1.msra.mxu0 0.0
          %911 = vmatprep.subr.mxu0 0.0
          %912 = vmatpush1.msra.mxu0 0.0
          %913 = vmatprep.subr.mxu0 0.0
          %914 = vmatpush1.msra.mxu0 0.0
          %915 = vmatprep.subr.mxu0 0.0
          %916 = vmatpush1.msra.mxu0 0.0
          %917 = vmatprep.subr.mxu0 0.0
          %918 = vmatpush1.msra.mxu0 0.0
          %919 = vmatprep.subr.mxu0 0.0
          %920 = vmatpush1.msra.mxu0 0.0
          %921 = vmatprep.subr.mxu0 0.0
          %922 = vmatpush1.msra.mxu0 0.0
          %923 = vmatprep.subr.mxu0 0.0
          %924 = vmatpush1.msra.mxu0 0.0
          %925 = vmatprep.subr.mxu0 0.0
          %926 = vmatpush1.msra.mxu0 0.0
          %927 = vmatprep.subr.mxu0 0.0
          %928 = vmatpush1.msra.mxu0 0.0
          %929 = vmatprep.subr.mxu0 0.0
          %930 = vmatpush1.msra.mxu0 0.0
          %931 = vmatprep.subr.mxu0 0.0
          %932 = vmatpush1.msra.mxu0 0.0
          %933 = vmatprep.subr.mxu0 0.0
          %934 = vmatpush1.msra.mxu0 0.0
          %935 = vmatprep.subr.mxu0 0.0
          %936 = vmatpush1.msra.mxu0 0.0
          %937 = vmatprep.subr.mxu0 0.0
          %938 = vmatpush1.msra.mxu0 0.0
          %939 = vmatprep.subr.mxu0 0.0
          %940 = vmatpush1.msra.mxu0 0.0
          %941 = vmatprep.subr.mxu0 0.0
          %942 = vmatpush1.msra.mxu0 0.0
          %943 = vmatprep.subr.mxu0 0.0
          %944 = vmatpush1.msra.mxu0 0.0
          %945 = vmatprep.subr.mxu0 0.0
          %946 = vmatpush1.msra.mxu0 0.0
          %947 = vmatprep.mubr.f32.mxu0 0.0
          %948 = vmatmul.mubr.f32.gmra.mrb[0].mxu0 %v881
          %v949 = vpop.f32.mrb[0].mxu0
          %v950 = vadd.f32 0.0, %v949
          %v951 = vpop.f32.mrb[0].mxu0
          %952 = vdwg.mxu0
          %v953 = vadd.f32 %v877, %v950
          %vm954 = vcmask 24576
          %955 = vst.msk [vmem:[#allocation8] sm:$0x1] %vm954, %v953
        $region72: #{cam_bigcn_forward.1} parent=59 // pred_fallthru
          _
        // Predicated region
        $region73: #{cam_bigcn_forward.1} parent=59 // pred_check
          %p956 = pneg %p692
        $region74: #{cam_bigcn_forward.1} parent=59 // pred_check_branch
          %958 = sbr.rel (%p956) target = $region76
        $region75: #{cam_bigcn_forward.1} parent=59 // pred_region
          %v959 = vld [vmem:[#allocation4] sm:$0xff]
          %v960 = vld [vmem:[#allocation4 + $0x8] sm:$0xff]
          %v961 = vld [vmem:[%s475] sm:$0x1]
          %v963 = vlaneseq
          %v964 = vshrl.u32 %v963, 7
          %v965 = vsub.s32 0, %v964
          %v966 = vrot.slane %v961, %v965
          %vm968 = vcmask 130048
          %v970 = vsel %vm968, %v600, 0
          %972 = vmatprep.subr.mxu0 0.0
          %973 = vmatpush1.msra.mxu0 %v959
          %974 = vmatprep.subr.mxu0 0.0
          %975 = vmatpush1.msra.mxu0 %v960
          %976 = vmatprep.subr.mxu0 0.0
          %977 = vmatpush1.msra.mxu0 0.0
          %978 = vmatprep.subr.mxu0 0.0
          %979 = vmatpush1.msra.mxu0 0.0
          %980 = vmatprep.subr.mxu0 0.0
          %981 = vmatpush1.msra.mxu0 0.0
          %982 = vmatprep.subr.mxu0 0.0
          %983 = vmatpush1.msra.mxu0 0.0
          %984 = vmatprep.subr.mxu0 0.0
          %985 = vmatpush1.msra.mxu0 0.0
          %986 = vmatprep.subr.mxu0 0.0
          %987 = vmatpush1.msra.mxu0 0.0
          %988 = vmatprep.subr.mxu0 0.0
          %989 = vmatpush1.msra.mxu0 0.0
          %990 = vmatprep.subr.mxu0 0.0
          %991 = vmatpush1.msra.mxu0 0.0
          %992 = vmatprep.subr.mxu0 0.0
          %993 = vmatpush1.msra.mxu0 0.0
          %994 = vmatprep.subr.mxu0 0.0
          %995 = vmatpush1.msra.mxu0 0.0
          %996 = vmatprep.subr.mxu0 0.0
          %997 = vmatpush1.msra.mxu0 0.0
          %998 = vmatprep.subr.mxu0 0.0
          %999 = vmatpush1.msra.mxu0 0.0
          %1000 = vmatprep.subr.mxu0 0.0
          %1001 = vmatpush1.msra.mxu0 0.0
          %1002 = vmatprep.subr.mxu0 0.0
          %1003 = vmatpush1.msra.mxu0 0.0
          %1004 = vmatprep.subr.mxu0 0.0
          %1005 = vmatpush1.msra.mxu0 0.0
          %1006 = vmatprep.subr.mxu0 0.0
          %1007 = vmatpush1.msra.mxu0 0.0
          %1008 = vmatprep.subr.mxu0 0.0
          %1009 = vmatpush1.msra.mxu0 0.0
          %1010 = vmatprep.subr.mxu0 0.0
          %1011 = vmatpush1.msra.mxu0 0.0
          %1012 = vmatprep.subr.mxu0 0.0
          %1013 = vmatpush1.msra.mxu0 0.0
          %1014 = vmatprep.subr.mxu0 0.0
          %1015 = vmatpush1.msra.mxu0 0.0
          %1016 = vmatprep.subr.mxu0 0.0
          %1017 = vmatpush1.msra.mxu0 0.0
          %1018 = vmatprep.subr.mxu0 0.0
          %1019 = vmatpush1.msra.mxu0 0.0
          %1020 = vmatprep.subr.mxu0 0.0
          %1021 = vmatpush1.msra.mxu0 0.0
          %1022 = vmatprep.subr.mxu0 0.0
          %1023 = vmatpush1.msra.mxu0 0.0
          %1024 = vmatprep.subr.mxu0 0.0
          %1025 = vmatpush1.msra.mxu0 0.0
          %1026 = vmatprep.subr.mxu0 0.0
          %1027 = vmatpush1.msra.mxu0 0.0
          %1028 = vmatprep.subr.mxu0 0.0
          %1029 = vmatpush1.msra.mxu0 0.0
          %1030 = vmatprep.subr.mxu0 0.0
          %1031 = vmatpush1.msra.mxu0 0.0
          %1032 = vmatprep.subr.mxu0 0.0
          %1033 = vmatpush1.msra.mxu0 0.0
          %1034 = vmatprep.subr.mxu0 0.0
          %1035 = vmatpush1.msra.mxu0 0.0
          %1036 = vmatprep.mubr.f32.mxu0 0.0
          %1037 = vmatmul.mubr.f32.gmra.mrb[0].mxu0 %v970
          %v1038 = vpop.f32.mrb[0].mxu0
          %v1039 = vadd.f32 %v966, %v1038
          %v1040 = vpop.f32.mrb[0].mxu0
          %1041 = vdwg.mxu0
          %v1042 = vmax.f32 %v1039, 0.0
          %v1043 = vld [vmem:[#allocation5] sm:$0x1]
          %v1044 = vsel %vm968, %v1042, 0.0
          %v1045 = vrot.slane %v1044, 4
          %v1046 = vadd.f32 %v1044, %v1045
          %v1047 = vrot.slane %v1046, 2
          %v1048 = vadd.f32 %v1046, %v1047
          %v1049 = vrot.slane %v1048, 1
          %v1050 = vadd.f32 %v1048, %v1049
          %v1051 = vadd.f32 %v1043, %v1050
          %vm1052 = vcmask 122880
          %1053 = vst.msk [vmem:[#allocation5] sm:$0x1] %vm1052, %v1051
        $region76: #{cam_bigcn_forward.1} parent=59 // pred_fallthru
          _
        %p1054 = scmp.eq.s32.totalorder %s31, 1
        %p1055 = pnand %p692, %p1054
        %p1056 = pneg %p1055
        // Predicated region
        $region77: #{cam_bigcn_forward.1} parent=59 // pred_check
          _
        $region78: #{cam_bigcn_forward.1} parent=59 // pred_check_branch
          %1058 = sbr.rel (%p1055) target = $region80
        $region79: #{cam_bigcn_forward.1} parent=59 // pred_region
          %v1059 = vld [vmem:[#allocation5] sm:$0x1]
          %v1060 = vmul.f32 %v1059, 0.0625
          %v1061 = vld [vmem:[#allocation8] sm:$0x1]
          %v1062 = vld [vmem:[%s480] sm:$0xff]
          %v1063 = vld [vmem:[%s480 + $0x8] sm:$0xff]
          %vm1064 = vcmask 130048
          %v1066 = vsel %vm1064, %v1060, 0
          %1068 = vmatprep.subr.mxu0 0.0
          %1069 = vmatpush1.msra.mxu0 %v1062
          %1070 = vmatprep.subr.mxu0 0.0
          %1071 = vmatpush1.msra.mxu0 %v1063
          %1072 = vmatprep.subr.mxu0 0.0
          %1073 = vmatpush1.msra.mxu0 0.0
          %1074 = vmatprep.subr.mxu0 0.0
          %1075 = vmatpush1.msra.mxu0 0.0
          %1076 = vmatprep.subr.mxu0 0.0
          %1077 = vmatpush1.msra.mxu0 0.0
          %1078 = vmatprep.subr.mxu0 0.0
          %1079 = vmatpush1.msra.mxu0 0.0
          %1080 = vmatprep.subr.mxu0 0.0
          %1081 = vmatpush1.msra.mxu0 0.0
          %1082 = vmatprep.subr.mxu0 0.0
          %1083 = vmatpush1.msra.mxu0 0.0
          %1084 = vmatprep.subr.mxu0 0.0
          %1085 = vmatpush1.msra.mxu0 0.0
          %1086 = vmatprep.subr.mxu0 0.0
          %1087 = vmatpush1.msra.mxu0 0.0
          %1088 = vmatprep.subr.mxu0 0.0
          %1089 = vmatpush1.msra.mxu0 0.0
          %1090 = vmatprep.subr.mxu0 0.0
          %1091 = vmatpush1.msra.mxu0 0.0
          %1092 = vmatprep.subr.mxu0 0.0
          %1093 = vmatpush1.msra.mxu0 0.0
          %1094 = vmatprep.subr.mxu0 0.0
          %1095 = vmatpush1.msra.mxu0 0.0
          %1096 = vmatprep.subr.mxu0 0.0
          %1097 = vmatpush1.msra.mxu0 0.0
          %1098 = vmatprep.subr.mxu0 0.0
          %1099 = vmatpush1.msra.mxu0 0.0
          %1100 = vmatprep.subr.mxu0 0.0
          %1101 = vmatpush1.msra.mxu0 0.0
          %1102 = vmatprep.subr.mxu0 0.0
          %1103 = vmatpush1.msra.mxu0 0.0
          %1104 = vmatprep.subr.mxu0 0.0
          %1105 = vmatpush1.msra.mxu0 0.0
          %1106 = vmatprep.subr.mxu0 0.0
          %1107 = vmatpush1.msra.mxu0 0.0
          %1108 = vmatprep.subr.mxu0 0.0
          %1109 = vmatpush1.msra.mxu0 0.0
          %1110 = vmatprep.subr.mxu0 0.0
          %1111 = vmatpush1.msra.mxu0 0.0
          %1112 = vmatprep.subr.mxu0 0.0
          %1113 = vmatpush1.msra.mxu0 0.0
          %1114 = vmatprep.subr.mxu0 0.0
          %1115 = vmatpush1.msra.mxu0 0.0
          %1116 = vmatprep.subr.mxu0 0.0
          %1117 = vmatpush1.msra.mxu0 0.0
          %1118 = vmatprep.subr.mxu0 0.0
          %1119 = vmatpush1.msra.mxu0 0.0
          %1120 = vmatprep.subr.mxu0 0.0
          %1121 = vmatpush1.msra.mxu0 0.0
          %1122 = vmatprep.subr.mxu0 0.0
          %1123 = vmatpush1.msra.mxu0 0.0
          %1124 = vmatprep.subr.mxu0 0.0
          %1125 = vmatpush1.msra.mxu0 0.0
          %1126 = vmatprep.subr.mxu0 0.0
          %1127 = vmatpush1.msra.mxu0 0.0
          %1128 = vmatprep.subr.mxu0 0.0
          %1129 = vmatpush1.msra.mxu0 0.0
          %1130 = vmatprep.subr.mxu0 0.0
          %1131 = vmatpush1.msra.mxu0 0.0
          %1132 = vmatprep.mubr.f32.mxu0 0.0
          %1133 = vmatmul.mubr.f32.gmra.mrb[0].mxu0 %v1066
          %v1134 = vpop.f32.mrb[0].mxu0
          %v1135 = vadd.f32 0.0, %v1134
          %v1136 = vpop.f32.mrb[0].mxu0
          %1137 = vdwg.mxu0
          %v1138 = vadd.f32 %v1061, %v1135
          %vm1139 = vcmask 24576
          %1140 = vst.msk [vmem:[#allocation8] sm:$0x1] %vm1139, %v1138
        $region80: #{cam_bigcn_forward.1} parent=59 // pred_fallthru
          _
        %p1141 = scmp.eq.s32.totalorder %s29, 1
        %p1142 = pnand %p1141, %p692
        %p1143 = pneg %p1142
        %p1144 = pnand %p1143, %p1054
        %p1145 = pneg %p1144
        // Predicated region
        $region81: #{cam_bigcn_forward.1} parent=59 // pred_check
          _
        $region82: #{cam_bigcn_forward.1} parent=59 // pred_check_branch
          %1147 = sbr.rel (%p1144) target = $region84
        $region83: #{cam_bigcn_forward.1} parent=59 // pred_region
          %v1148 = vld [vmem:[#allocation8] sm:$0x1]
          %vm1149 = vcmask 24576
          %v1150 = vsel %vm1149, %v1148, -inf
          %1151 = vmax.xlane.f32.xlu0 %v1150
          %v1152 = vpop.xlane.xlu0 %1151
          %v1153 = vsub.f32 %v1148, %v1152
          %v1154 = vmul.f32 %v1153, 1.442695
          %v1155 = vpow.pop %v1154
          %v1156 = vsel %vm1149, %v1155, 0.0
          %1157 = vadd.xlane.f32.xlu0 %v1156
          %v1158 = vpop.xlane.xlu0 %1157
          %v1159 = vlog2.pop %v1158
          %v1160 = vmul.f32 %v1159, 0.6931472
          %v1161 = vsub.f32 %v1153, %v1160
          %1162 = vst.msk [vmem:[#allocation8] sm:$0x1] %vm1149, %v1161
        $region84: #{cam_bigcn_forward.1} parent=59 // pred_fallthru
          _
        // Predicated region
        $region85: #{cam_bigcn_forward.1} parent=59 // pred_check
          %p1163 = pneg %p303
        $region86: #{cam_bigcn_forward.1} parent=59 // pred_check_branch
          %1165 = sbr.rel (%p1163) target = $region88
        $region87: #{cam_bigcn_forward.1} parent=59 // pred_region
          %s1167 = ssub.s32 16, 16
          %1168 = vsyncadd [#allocation9], %s1167
          %s1170 = sshll.u32 [#allocation8], 4
          %s1171 = int_to_ptr.vmem [resolvable:$true] %s1170
          %1173 = dma.vmem_to_hbm [thread:$0]  %s1171, 16, %s11, [#allocation9]
        $region88: #{cam_bigcn_forward.1} parent=59 // pred_fallthru
          _
        // Predicated region
        $region89: #{cam_bigcn_forward.1} parent=59 // pred_check
          %p1174 = pneg %p303
        $region90: #{cam_bigcn_forward.1} parent=59 // pred_check_branch
          %1176 = sbr.rel (%p1174) target = $region92
        $region91: #{cam_bigcn_forward.1} parent=59 // pred_region
          %1177 = dma.done [#allocation9], 16
        $region92: #{cam_bigcn_forward.1} parent=59 // pred_fallthru
          _
      $region60: #{cam_bigcn_forward.1} parent=5 // pred_fallthru
        _
      %p1178 = scmp.le.s32.totalorder 2, %s19
      // Predicated region
      $region93: #{cam_bigcn_forward.1} parent=5 // pred_check
        %p1179 = pneg %p1178
      $region94: #{cam_bigcn_forward.1} parent=5 // pred_check_branch
        %1181 = sbr.rel (%p1179) target = $region96
      $region95: #{cam_bigcn_forward.1} parent=5 // pred_region
        %s1182 = ssub.s32 %s19, 2
      $region96: #{cam_bigcn_forward.1} parent=5 // pred_fallthru
        _
    $region6: #{cam_bigcn_forward.1} parent=1 // loop_footer
      %s23 = sadd.s32 1, %s19
    $region7: #{cam_bigcn_forward.1} parent=1 // loop_footer_branch
      %18 = sbr.rel target = $region3
    $region8: #{cam_bigcn_forward.1} parent=1 // loop_exit
      _
    %1183 = vsyncpa [#allocation9], 1
    %s1184 = scalar_lea.sflag [#allocation9], 1
    %1185 = vsyncpa %s1184, 1

</llo_original>
